<compile_context>
chip_gen: v7x
topology: tpu7x:2x2x1
jax: 0.10.0
libtpu: 0.0.40
codegen_flags: <defaults>
</compile_context>

<pallas_src>
import jax
import jax.numpy as jnp
from jax import lax
from jax.experimental import pallas as pl
from jax.experimental.pallas import tpu as pltpu


def _hswish(x):
    return x * jnp.clip(x + 3.0, 0.0, 6.0) * (1.0 / 6.0)


def _hsigmoid(x):
    return jnp.clip(x + 3.0, 0.0, 6.0) * (1.0 / 6.0)


# ---------------------------------------------------------------------------
# Kernel
# ---------------------------------------------------------------------------
def _make_block_kernel(H, W, K, stride, Cin, E, Cout, use_proj, mxu_dtype):
    P = K // 2
    Ho = (H + 2 * P - K) // stride + 1
    Wo = (W + 2 * P - K) // stride + 1
    Wpad = W + 2 * P
    SC_W = W * Cout if use_proj else 0          # fused-shortcut section width
    TOP = ((P + 7) // 8) * 8                    # sublane-aligned top pad rows

    def kernel(x_ref, wf_ref, sbf_ref, wdw_ref, sb2_ref, w3_ref, sb3_ref,
               wse1_ref, sbse1_ref, wse2_ref, sbse2_ref, o_ref, pad_scr):
        x = x_ref[0]                                         # (H, W*Cin)

        # ---- fused [shortcut | conv1 + SAME-pad] 1x1 matmul + BN ----
        h = jnp.dot(x.astype(mxu_dtype), wf_ref[...],
                    preferred_element_type=jnp.float32)      # (H, SC_W+Wpad*E)
        h = h * sbf_ref[0] + sbf_ref[1]
        if use_proj:
            sc = h[:, :SC_W]                                 # BN'd shortcut
            h1 = _hswish(h[:, SC_W:])                        # (H, Wpad*E)
        else:
            sc = x                                           # identity shortcut
            h1 = _hswish(h)
        # Pad columns carry weight/scale/bias == 0, and hswish(0) == 0 exactly,
        # so h1 already contains the depthwise SAME zero-padding columns.

        # ---- depthwise KxK conv: padded scratch + K*K shifted VPU MACs ----
        if P > 0:
            zrow = jnp.zeros((P, Wpad * E), jnp.float32)
            pad_scr[TOP - P:TOP, :] = zrow                   # top border only
            pad_scr[TOP + H:TOP + H + P, :] = zrow           # bottom border only
        pad_scr[TOP:TOP + H, :] = h1                         # one aligned store

        acc = jnp.zeros((Ho, W * E), jnp.float32)
        for ki in range(K):
            r0 = TOP - P + ki
            rows = (slice(r0, r0 + Ho) if stride == 1
                    else pl.ds(r0, Ho, stride))              # sublane stride
            for kj in range(K):
                win = pad_scr[rows, kj * E:kj * E + W * E]   # (Ho, W*E)
                acc = acc + win * wdw_ref[ki * K + kj]       # per-channel MAC
        h2 = _hswish(acc * sb2_ref[0] + sb2_ref[1])          # (Ho, W*E)

        # ---- conv3 (1x1 project, block-diag, folds column stride) + BN3 ----
        h3 = jnp.dot(h2.astype(mxu_dtype), w3_ref[...],
                     preferred_element_type=jnp.float32)     # (Ho, Wo*Cout)
        h3 = h3 * sb3_ref[0] + sb3_ref[1]

        # ---- SE module (global pool folded into packed SE weights) ----
        pooled = jnp.mean(h3, axis=0, keepdims=True)         # (1, Wo*Cout)
        se = jnp.dot(pooled.astype(mxu_dtype), wse1_ref[...],
                     preferred_element_type=jnp.float32)     # (1, Cse)
        se = jnp.maximum(se * sbse1_ref[0] + sbse1_ref[1], 0.0)
        gate = jnp.dot(se.astype(mxu_dtype), wse2_ref[...],
                       preferred_element_type=jnp.float32)   # (1, Wo*Cout)
        gate = _hsigmoid(gate * sbse2_ref[0] + sbse2_ref[1])
        out = h3 * gate

        # ---- residual (stride == 1 only) ----
        if stride == 1:
            out = out + sc

        o_ref[0] = out.astype(o_ref.dtype)                   # lane-dense store

    pad_rows = TOP + H + P
    return kernel, Ho, Wo, Wpad, pad_rows


# ---------------------------------------------------------------------------
# Wrapper-side weight packing into the lane-fused layout
# ---------------------------------------------------------------------------
def _pack_params(p, *, W, K, stride, use_proj, mxu_dtype):
    P = K // 2
    E = p["w1"].shape[1]
    Cout = p["w3"].shape[1]
    Wo = (W + 2 * P - K) // stride + 1

    eye_w = jnp.eye(W, dtype=jnp.float32)
    # conv1: block-diagonal over pixel columns, shifted by P zero columns so the
    # matmul emits the depthwise SAME padding directly; BN1 folded alongside.
    w1_bd = jnp.pad(jnp.kron(eye_w, p["w1"]), ((0, 0), (P * E, P * E)))
    sb1_p = jnp.pad(jnp.tile(p["sb1"], (1, W)), ((0, 0), (P * E, P * E)))
    if use_proj:
        wsc_bd = jnp.kron(eye_w, p["wsc"])                   # (W*Cin, W*Cout)
        wf = jnp.concatenate([wsc_bd, w1_bd], axis=1)
        sbf = jnp.concatenate([jnp.tile(p["sbsc"], (1, W)), sb1_p], axis=1)
    else:
        wf, sbf = w1_bd, sb1_p

    wdw_p = jnp.tile(p["wdw"], (1, W))                       # (K*K, W*E)
    sb2_p = jnp.tile(p["sb2"], (1, W))                       # (2,   W*E)

    # conv3: block-diagonal that also selects every stride-th pixel column.
    sel = jnp.zeros((W, Wo), jnp.float32)
    sel = sel.at[jnp.arange(Wo) * stride, jnp.arange(Wo)].set(1.0)
    w3_bd = jnp.kron(sel, p["w3"])                           # (W*E, Wo*Cout)
    sb3_p = jnp.tile(p["sb3"], (1, Wo))

    wse1_p = jnp.tile(p["wse1"], (Wo, 1)) / float(Wo)        # pool folded in
    wse2_p = jnp.tile(p["wse2"], (1, Wo))                    # (Cse, Wo*Cout)
    sbse2_p = jnp.tile(p["sbse2"], (1, Wo))

    cast = lambda a: a.astype(mxu_dtype)                     # MXU operands only
    return [cast(wf), sbf, wdw_p, sb2_p, cast(w3_bd), sb3_p,
            cast(wse1_p), p["sbse1"], cast(wse2_p), sbse2_p]


def _full_spec(shape):
    nd = len(shape)
    return pl.BlockSpec(shape, lambda n, _nd=nd: (0,) * _nd)


def block_forward(x_nhwc, params, *, K, stride, mxu_dtype=jnp.float32):
    """x_nhwc: (N, H, W, Cin) float32. Returns (N, Ho, Wo, Cout) float32.

    Set mxu_dtype=jnp.bfloat16 on v6e/v7x for native-MXU throughput (elementwise
    math stays f32); keep f32 on v5e / for bit-tight comparisons.
    """
    N, H, W, Cin = x_nhwc.shape
    E = params["w1"].shape[1]
    Cout = params["w3"].shape[1]
    use_proj = (stride == 1 and Cin != Cout)

    kernel, Ho, Wo, Wpad, pad_rows = _make_block_kernel(
        H, W, K, stride, Cin, E, Cout, use_proj, mxu_dtype)

    x_packed = x_nhwc.reshape(N, H, W * Cin)                 # lane-dense DMA
    weight_args = _pack_params(params, W=W, K=K, stride=stride,
                               use_proj=use_proj, mxu_dtype=mxu_dtype)

    grid_spec = pltpu.PrefetchScalarGridSpec(
        num_scalar_prefetch=0,
        grid=(N,),
        in_specs=[pl.BlockSpec((1, H, W * Cin), lambda n: (n, 0, 0))]
                 + [_full_spec(a.shape) for a in weight_args],
        out_specs=pl.BlockSpec((1, Ho, Wo * Cout), lambda n: (n, 0, 0)),
        scratch_shapes=[pltpu.VMEM((pad_rows, Wpad * E), jnp.float32)],
    )

    # TODO(synk): for real MobileNetV3 shapes (H,W up to 112, E up to 960) add a
    # spatial row-tile grid axis (with K-1 halo rows) and an explicit
    # vmem_limit_bytes so pad_scr fits v7x's 64 MiB VMEM and both TCs stay busy.
    out = pl.pallas_call(
        kernel,
        out_shape=jax.ShapeDtypeStruct((N, Ho, Wo * Cout), jnp.float32),
        grid_spec=grid_spec,
        compiler_params=pltpu.CompilerParams(dimension_semantics=("parallel",)),
    )(x_packed, *weight_args)
    return out.reshape(N, Ho, Wo, Cout)


# ---------------------------------------------------------------------------
# Deterministic parameter construction (eval-mode BN folded to scale/bias).
# ---------------------------------------------------------------------------
def _fold_bn(gamma, beta, mean, var, eps=1e-5):
    scale = gamma / jnp.sqrt(var + eps)
    bias = beta - mean * scale
    return jnp.stack([scale, bias], axis=0)                  # (2, C)


def init_params(key, K, Cin, E, Cout, Cse):
    keys = iter(jax.random.split(key, 40))

    def w(shape, scale=0.1):
        return scale * jax.random.normal(next(keys), shape, jnp.float32)

    def bn(c):
        gamma = 0.5 + jax.random.uniform(next(keys), (c,), jnp.float32)
        beta = 0.1 * jax.random.normal(next(keys), (c,), jnp.float32)
        mean = 0.1 * jax.random.normal(next(keys), (c,), jnp.float32)
        var = 0.5 + jax.random.uniform(next(keys), (c,), jnp.float32)
        return _fold_bn(gamma, beta, mean, var)

    return {
        "w1":    w((Cin, E)),          "sb1":   bn(E),       # conv1 + bn1
        "wdw":   w((K * K, E)),        "sb2":   bn(E),       # depthwise + bn2
        "w3":    w((E, Cout)),         "sb3":   bn(Cout),    # conv3 + bn3
        "wse1":  w((Cout, Cse)),       "sbse1": bn(Cse),     # SE reduce + bn
        "wse2":  w((Cse, Cout)),       "sbse2": bn(Cout),    # SE expand + bn
        "wsc":   w((Cin, Cout)),       "sbsc":  bn(Cout),    # shortcut + bn
    }


# ---------------------------------------------------------------------------
# Pure-JAX reference (same semantics as the PyTorch forward, NHWC).
# ---------------------------------------------------------------------------
def ref_block(x, p, K, stride):
    P = K // 2
    E = p["w1"].shape[1]
    h = jnp.einsum("nhwc,ce->nhwe", x, p["w1"])
    h = _hswish(h * p["sb1"][0] + p["sb1"][1])
    wdw = p["wdw"].reshape(K, K, 1, E)
    h = lax.conv_general_dilated(
        h, wdw, (stride, stride), [(P, P), (P, P)],
        dimension_numbers=("NHWC", "HWIO", "NHWC"), feature_group_count=E)
    h = _hswish(h * p["sb2"][0] + p["sb2"][1])
    h = jnp.einsum("nhwe,eo->nhwo", h, p["w3"])
    h = h * p["sb3"][0] + p["sb3"][1]
    pooled = h.mean(axis=(1, 2), keepdims=True)
    se = jnp.einsum("nhwo,os->nhws", pooled, p["wse1"])
    se = jnp.maximum(se * p["sbse1"][0] + p["sbse1"][1], 0.0)
    se = jnp.einsum("nhws,so->nhwo", se, p["wse2"])
    se = _hsigmoid(se * p["sbse2"][0] + p["sbse2"][1])
    out = h * se
    if stride == 1:
        if x.shape[-1] != out.shape[-1]:
            sc = jnp.einsum("nhwc,co->nhwo", x, p["wsc"])
            sc = sc * p["sbsc"][0] + p["sbsc"][1]
        else:
            sc = x
        out = out + sc
    return out


if __name__ == "__main__":
    # Block(kernel_size=3, in_channel=4, expand_size=16, out_channel=8,
    #       nolinear=hswish, semodule=SeModule(8), stride=1)
    N, H, W = 2, 16, 16
    K, Cin, E, Cout, stride = 3, 4, 16, 8, 1
    Cse = Cout // 4

    key = jax.random.PRNGKey(0)
    kp, kx = jax.random.split(key)
    params = init_params(kp, K, Cin, E, Cout, Cse)

    x_nchw = jax.random.normal(kx, (N, Cin, H, W), jnp.float32)  # PyTorch layout
    x_nhwc = jnp.transpose(x_nchw, (0, 2, 3, 1))                 # kernel layout

    out = block_forward(x_nhwc, params, K=K, stride=stride)
    out = jax.block_until_ready(out)

    ref = ref_block(x_nhwc, params, K, stride)
    assert out.shape == ref.shape, (out.shape, ref.shape)
    max_err = float(jnp.max(jnp.abs(out - ref)))
    assert jnp.allclose(out, ref, atol=1e-4, rtol=1e-4), max_err

    print("KERNEL_OK")
</pallas_src>

<mosaic_0001>
module attributes {stable_mosaic.version = 11 : i64} {
  func.func @kernel(%arg0: i32, %arg1: memref<1x16x64xf32, #tpu.memory_space<vmem>>, %arg2: memref<64x416xf32, #tpu.memory_space<vmem>>, %arg3: memref<2x416xf32, #tpu.memory_space<vmem>>, %arg4: memref<9x256xf32, #tpu.memory_space<vmem>>, %arg5: memref<2x256xf32, #tpu.memory_space<vmem>>, %arg6: memref<256x128xf32, #tpu.memory_space<vmem>>, %arg7: memref<2x128xf32, #tpu.memory_space<vmem>>, %arg8: memref<128x2xf32, #tpu.memory_space<vmem>>, %arg9: memref<2x2xf32, #tpu.memory_space<vmem>>, %arg10: memref<2x128xf32, #tpu.memory_space<vmem>>, %arg11: memref<2x128xf32, #tpu.memory_space<vmem>>, %arg12: memref<1x16x128xf32, #tpu.memory_space<vmem>>, %arg13: memref<25x288xf32, #tpu.memory_space<vmem>>) attributes {dimension_semantics = [#tpu.dimension_semantics<parallel>], iteration_bounds = array<i64: 2>, scalar_prefetch = 0 : i64, scratch_operands = 1 : i64, tpu.core_type = #tpu.core_type<tc>, window_params = [{transform_indices = @transform_0, window_bounds = array<i64: 1, 16, 64>}, {pipeline_mode = #tpu.pipeline_mode<synchronous>, transform_indices = @transform_1, window_bounds = array<i64: 64, 416>}, {pipeline_mode = #tpu.pipeline_mode<synchronous>, transform_indices = @transform_2, window_bounds = array<i64: 2, 416>}, {pipeline_mode = #tpu.pipeline_mode<synchronous>, transform_indices = @transform_3, window_bounds = array<i64: 9, 256>}, {pipeline_mode = #tpu.pipeline_mode<synchronous>, transform_indices = @transform_4, window_bounds = array<i64: 2, 256>}, {pipeline_mode = #tpu.pipeline_mode<synchronous>, transform_indices = @transform_5, window_bounds = array<i64: 256, 128>}, {pipeline_mode = #tpu.pipeline_mode<synchronous>, transform_indices = @transform_6, window_bounds = array<i64: 2, 128>}, {pipeline_mode = #tpu.pipeline_mode<synchronous>, transform_indices = @transform_7, window_bounds = array<i64: 128, 2>}, {pipeline_mode = #tpu.pipeline_mode<synchronous>, transform_indices = @transform_8, window_bounds = array<i64: 2, 2>}, {pipeline_mode = #tpu.pipeline_mode<synchronous>, transform_indices = @transform_9, window_bounds = array<i64: 2, 128>}, {pipeline_mode = #tpu.pipeline_mode<synchronous>, transform_indices = @transform_10, window_bounds = array<i64: 2, 128>}, {transform_indices = @transform_11, window_bounds = array<i64: 1, 16, 128>}]} {
    %c0 = arith.constant 0 : index
    %c0_0 = arith.constant 0 : index
    %c0_1 = arith.constant 0 : index
    %0 = vector.load %arg1[%c0, %c0_0, %c0_1] : memref<1x16x64xf32, #tpu.memory_space<vmem>>, vector<1x16x64xf32>
    %1 = vector.shape_cast %0 : vector<1x16x64xf32> to vector<16x64xf32>
    %c0_2 = arith.constant 0 : index
    %c0_3 = arith.constant 0 : index
    %2 = vector.load %arg2[%c0_2, %c0_3] : memref<64x416xf32, #tpu.memory_space<vmem>>, vector<64x416xf32>
    %cst = arith.constant dense<0.000000e+00> : vector<16x416xf32>
    %3 = tpu.matmul %1, %2, %cst {dimension_numbers = #tpu.dot_dimension_numbers<[1], [0], [0], [1], [0, 0, 1, 1], [], []>} : vector<16x64xf32>, vector<64x416xf32>, vector<16x416xf32> -> vector<16x416xf32>
    %c0_4 = arith.constant 0 : index
    %c0_5 = arith.constant 0 : index
    %4 = vector.load %arg3[%c0_4, %c0_5] : memref<2x416xf32, #tpu.memory_space<vmem>>, vector<1x416xf32>
    %5 = vector.shape_cast %4 : vector<1x416xf32> to vector<416xf32>
    %6 = vector.shape_cast %5 : vector<416xf32> to vector<1x416xf32>
    %7 = vector.broadcast %6 : vector<1x416xf32> to vector<16x416xf32>
    %8 = arith.mulf %3, %7 : vector<16x416xf32>
    %c1 = arith.constant 1 : index
    %c0_6 = arith.constant 0 : index
    %9 = vector.load %arg3[%c1, %c0_6] : memref<2x416xf32, #tpu.memory_space<vmem>>, vector<1x416xf32>
    %10 = vector.shape_cast %9 : vector<1x416xf32> to vector<416xf32>
    %11 = vector.shape_cast %10 : vector<416xf32> to vector<1x416xf32>
    %12 = vector.broadcast %11 : vector<1x416xf32> to vector<16x416xf32>
    %13 = arith.addf %8, %12 : vector<16x416xf32>
    %14 = vector.extract_strided_slice %13 {offsets = [0, 0], sizes = [16, 128], strides = [1, 1]} : vector<16x416xf32> to vector<16x128xf32>
    %15 = vector.extract_strided_slice %13 {offsets = [0, 128], sizes = [16, 288], strides = [1, 1]} : vector<16x416xf32> to vector<16x288xf32>
    %cst_7 = arith.constant 3.000000e+00 : f32
    %16 = vector.broadcast %cst_7 : f32 to vector<16x288xf32>
    %17 = arith.addf %15, %16 : vector<16x288xf32>
    %cst_8 = arith.constant 0.000000e+00 : f32
    %cst_9 = arith.constant 6.000000e+00 : f32
    %18 = vector.broadcast %cst_8 : f32 to vector<16x288xf32>
    %19 = arith.maximumf %18, %17 : vector<16x288xf32>
    %20 = vector.broadcast %cst_9 : f32 to vector<16x288xf32>
    %21 = arith.minimumf %20, %19 : vector<16x288xf32>
    %22 = arith.mulf %15, %21 : vector<16x288xf32>
    %cst_10 = arith.constant 0.166666672 : f32
    %23 = vector.broadcast %cst_10 : f32 to vector<16x288xf32>
    %24 = arith.mulf %22, %23 : vector<16x288xf32>
    %cst_11 = arith.constant 0.000000e+00 : f32
    %25 = vector.broadcast %cst_11 : f32 to vector<1x288xf32>
    %c7 = arith.constant 7 : index
    %c0_12 = arith.constant 0 : index
    %26 = vector.load %arg13[%c7, %c0_12] : memref<25x288xf32, #tpu.memory_space<vmem>>, vector<1x288xf32>
    tpu.vector_store %arg13[%c7, %c0_12], %25 {strides = array<i32>} : memref<25x288xf32, #tpu.memory_space<vmem>>, vector<1x288xf32>,
    %c24 = arith.constant 24 : index
    %c0_13 = arith.constant 0 : index
    %27 = vector.load %arg13[%c24, %c0_13] : memref<25x288xf32, #tpu.memory_space<vmem>>, vector<1x288xf32>
    tpu.vector_store %arg13[%c24, %c0_13], %25 {strides = array<i32>} : memref<25x288xf32, #tpu.memory_space<vmem>>, vector<1x288xf32>,
    %c8 = arith.constant 8 : index
    %c0_14 = arith.constant 0 : index
    %28 = vector.load %arg13[%c8, %c0_14] : memref<25x288xf32, #tpu.memory_space<vmem>>, vector<16x288xf32>
    tpu.vector_store %arg13[%c8, %c0_14], %24 {strides = array<i32>} : memref<25x288xf32, #tpu.memory_space<vmem>>, vector<16x288xf32>,
    %cst_15 = arith.constant 0.000000e+00 : f32
    %29 = vector.broadcast %cst_15 : f32 to vector<16x256xf32>
    %c7_16 = arith.constant 7 : index
    %c0_17 = arith.constant 0 : index
    %30 = vector.load %arg13[%c7_16, %c0_17] : memref<25x288xf32, #tpu.memory_space<vmem>>, vector<16x256xf32>
    %c0_18 = arith.constant 0 : index
    %c0_19 = arith.constant 0 : index
    %31 = vector.load %arg4[%c0_18, %c0_19] : memref<9x256xf32, #tpu.memory_space<vmem>>, vector<1x256xf32>
    %32 = vector.shape_cast %31 : vector<1x256xf32> to vector<256xf32>
    %33 = vector.shape_cast %32 : vector<256xf32> to vector<1x256xf32>
    %34 = vector.broadcast %33 : vector<1x256xf32> to vector<16x256xf32>
    %35 = arith.mulf %30, %34 : vector<16x256xf32>
    %36 = arith.addf %29, %35 : vector<16x256xf32>
    %c7_20 = arith.constant 7 : index
    %c16 = arith.constant 16 : index
    %37 = vector.load %arg13[%c7_20, %c16] : memref<25x288xf32, #tpu.memory_space<vmem>>, vector<16x256xf32>
    %c1_21 = arith.constant 1 : index
    %c0_22 = arith.constant 0 : index
    %38 = vector.load %arg4[%c1_21, %c0_22] : memref<9x256xf32, #tpu.memory_space<vmem>>, vector<1x256xf32>
    %39 = vector.shape_cast %38 : vector<1x256xf32> to vector<256xf32>
    %40 = vector.shape_cast %39 : vector<256xf32> to vector<1x256xf32>
    %41 = vector.broadcast %40 : vector<1x256xf32> to vector<16x256xf32>
    %42 = arith.mulf %37, %41 : vector<16x256xf32>
    %43 = arith.addf %36, %42 : vector<16x256xf32>
    %c7_23 = arith.constant 7 : index
    %c32 = arith.constant 32 : index
    %44 = vector.load %arg13[%c7_23, %c32] : memref<25x288xf32, #tpu.memory_space<vmem>>, vector<16x256xf32>
    %c2 = arith.constant 2 : index
    %c0_24 = arith.constant 0 : index
    %45 = vector.load %arg4[%c2, %c0_24] : memref<9x256xf32, #tpu.memory_space<vmem>>, vector<1x256xf32>
    %46 = vector.shape_cast %45 : vector<1x256xf32> to vector<256xf32>
    %47 = vector.shape_cast %46 : vector<256xf32> to vector<1x256xf32>
    %48 = vector.broadcast %47 : vector<1x256xf32> to vector<16x256xf32>
    %49 = arith.mulf %44, %48 : vector<16x256xf32>
    %50 = arith.addf %43, %49 : vector<16x256xf32>
    %c8_25 = arith.constant 8 : index
    %c0_26 = arith.constant 0 : index
    %51 = vector.load %arg13[%c8_25, %c0_26] : memref<25x288xf32, #tpu.memory_space<vmem>>, vector<16x256xf32>
    %c3 = arith.constant 3 : index
    %c0_27 = arith.constant 0 : index
    %52 = vector.load %arg4[%c3, %c0_27] : memref<9x256xf32, #tpu.memory_space<vmem>>, vector<1x256xf32>
    %53 = vector.shape_cast %52 : vector<1x256xf32> to vector<256xf32>
    %54 = vector.shape_cast %53 : vector<256xf32> to vector<1x256xf32>
    %55 = vector.broadcast %54 : vector<1x256xf32> to vector<16x256xf32>
    %56 = arith.mulf %51, %55 : vector<16x256xf32>
    %57 = arith.addf %50, %56 : vector<16x256xf32>
    %c8_28 = arith.constant 8 : index
    %c16_29 = arith.constant 16 : index
    %58 = vector.load %arg13[%c8_28, %c16_29] : memref<25x288xf32, #tpu.memory_space<vmem>>, vector<16x256xf32>
    %c4 = arith.constant 4 : index
    %c0_30 = arith.constant 0 : index
    %59 = vector.load %arg4[%c4, %c0_30] : memref<9x256xf32, #tpu.memory_space<vmem>>, vector<1x256xf32>
    %60 = vector.shape_cast %59 : vector<1x256xf32> to vector<256xf32>
    %61 = vector.shape_cast %60 : vector<256xf32> to vector<1x256xf32>
    %62 = vector.broadcast %61 : vector<1x256xf32> to vector<16x256xf32>
    %63 = arith.mulf %58, %62 : vector<16x256xf32>
    %64 = arith.addf %57, %63 : vector<16x256xf32>
    %c8_31 = arith.constant 8 : index
    %c32_32 = arith.constant 32 : index
    %65 = vector.load %arg13[%c8_31, %c32_32] : memref<25x288xf32, #tpu.memory_space<vmem>>, vector<16x256xf32>
    %c5 = arith.constant 5 : index
    %c0_33 = arith.constant 0 : index
    %66 = vector.load %arg4[%c5, %c0_33] : memref<9x256xf32, #tpu.memory_space<vmem>>, vector<1x256xf32>
    %67 = vector.shape_cast %66 : vector<1x256xf32> to vector<256xf32>
    %68 = vector.shape_cast %67 : vector<256xf32> to vector<1x256xf32>
    %69 = vector.broadcast %68 : vector<1x256xf32> to vector<16x256xf32>
    %70 = arith.mulf %65, %69 : vector<16x256xf32>
    %71 = arith.addf %64, %70 : vector<16x256xf32>
    %c9 = arith.constant 9 : index
    %c0_34 = arith.constant 0 : index
    %72 = vector.load %arg13[%c9, %c0_34] : memref<25x288xf32, #tpu.memory_space<vmem>>, vector<16x256xf32>
    %c6 = arith.constant 6 : index
    %c0_35 = arith.constant 0 : index
    %73 = vector.load %arg4[%c6, %c0_35] : memref<9x256xf32, #tpu.memory_space<vmem>>, vector<1x256xf32>
    %74 = vector.shape_cast %73 : vector<1x256xf32> to vector<256xf32>
    %75 = vector.shape_cast %74 : vector<256xf32> to vector<1x256xf32>
    %76 = vector.broadcast %75 : vector<1x256xf32> to vector<16x256xf32>
    %77 = arith.mulf %72, %76 : vector<16x256xf32>
    %78 = arith.addf %71, %77 : vector<16x256xf32>
    %c9_36 = arith.constant 9 : index
    %c16_37 = arith.constant 16 : index
    %79 = vector.load %arg13[%c9_36, %c16_37] : memref<25x288xf32, #tpu.memory_space<vmem>>, vector<16x256xf32>
    %c7_38 = arith.constant 7 : index
    %c0_39 = arith.constant 0 : index
    %80 = vector.load %arg4[%c7_38, %c0_39] : memref<9x256xf32, #tpu.memory_space<vmem>>, vector<1x256xf32>
    %81 = vector.shape_cast %80 : vector<1x256xf32> to vector<256xf32>
    %82 = vector.shape_cast %81 : vector<256xf32> to vector<1x256xf32>
    %83 = vector.broadcast %82 : vector<1x256xf32> to vector<16x256xf32>
    %84 = arith.mulf %79, %83 : vector<16x256xf32>
    %85 = arith.addf %78, %84 : vector<16x256xf32>
    %c9_40 = arith.constant 9 : index
    %c32_41 = arith.constant 32 : index
    %86 = vector.load %arg13[%c9_40, %c32_41] : memref<25x288xf32, #tpu.memory_space<vmem>>, vector<16x256xf32>
    %c8_42 = arith.constant 8 : index
    %c0_43 = arith.constant 0 : index
    %87 = vector.load %arg4[%c8_42, %c0_43] : memref<9x256xf32, #tpu.memory_space<vmem>>, vector<1x256xf32>
    %88 = vector.shape_cast %87 : vector<1x256xf32> to vector<256xf32>
    %89 = vector.shape_cast %88 : vector<256xf32> to vector<1x256xf32>
    %90 = vector.broadcast %89 : vector<1x256xf32> to vector<16x256xf32>
    %91 = arith.mulf %86, %90 : vector<16x256xf32>
    %92 = arith.addf %85, %91 : vector<16x256xf32>
    %c0_44 = arith.constant 0 : index
    %c0_45 = arith.constant 0 : index
    %93 = vector.load %arg5[%c0_44, %c0_45] : memref<2x256xf32, #tpu.memory_space<vmem>>, vector<1x256xf32>
    %94 = vector.shape_cast %93 : vector<1x256xf32> to vector<256xf32>
    %95 = vector.shape_cast %94 : vector<256xf32> to vector<1x256xf32>
    %96 = vector.broadcast %95 : vector<1x256xf32> to vector<16x256xf32>
    %97 = arith.mulf %92, %96 : vector<16x256xf32>
    %c1_46 = arith.constant 1 : index
    %c0_47 = arith.constant 0 : index
    %98 = vector.load %arg5[%c1_46, %c0_47] : memref<2x256xf32, #tpu.memory_space<vmem>>, vector<1x256xf32>
    %99 = vector.shape_cast %98 : vector<1x256xf32> to vector<256xf32>
    %100 = vector.shape_cast %99 : vector<256xf32> to vector<1x256xf32>
    %101 = vector.broadcast %100 : vector<1x256xf32> to vector<16x256xf32>
    %102 = arith.addf %97, %101 : vector<16x256xf32>
    %cst_48 = arith.constant 3.000000e+00 : f32
    %103 = vector.broadcast %cst_48 : f32 to vector<16x256xf32>
    %104 = arith.addf %102, %103 : vector<16x256xf32>
    %cst_49 = arith.constant 0.000000e+00 : f32
    %cst_50 = arith.constant 6.000000e+00 : f32
    %105 = vector.broadcast %cst_49 : f32 to vector<16x256xf32>
    %106 = arith.maximumf %105, %104 : vector<16x256xf32>
    %107 = vector.broadcast %cst_50 : f32 to vector<16x256xf32>
    %108 = arith.minimumf %107, %106 : vector<16x256xf32>
    %109 = arith.mulf %102, %108 : vector<16x256xf32>
    %cst_51 = arith.constant 0.166666672 : f32
    %110 = vector.broadcast %cst_51 : f32 to vector<16x256xf32>
    %111 = arith.mulf %109, %110 : vector<16x256xf32>
    %c0_52 = arith.constant 0 : index
    %c0_53 = arith.constant 0 : index
    %112 = vector.load %arg6[%c0_52, %c0_53] : memref<256x128xf32, #tpu.memory_space<vmem>>, vector<256x128xf32>
    %cst_54 = arith.constant dense<0.000000e+00> : vector<16x128xf32>
    %113 = tpu.matmul %111, %112, %cst_54 {dimension_numbers = #tpu.dot_dimension_numbers<[1], [0], [0], [1], [0, 0, 1, 1], [], []>} : vector<16x256xf32>, vector<256x128xf32>, vector<16x128xf32> -> vector<16x128xf32>
    %c0_55 = arith.constant 0 : index
    %c0_56 = arith.constant 0 : index
    %114 = vector.load %arg7[%c0_55, %c0_56] : memref<2x128xf32, #tpu.memory_space<vmem>>, vector<1x128xf32>
    %115 = vector.shape_cast %114 : vector<1x128xf32> to vector<128xf32>
    %116 = vector.shape_cast %115 : vector<128xf32> to vector<1x128xf32>
    %117 = vector.broadcast %116 : vector<1x128xf32> to vector<16x128xf32>
    %118 = arith.mulf %113, %117 : vector<16x128xf32>
    %c1_57 = arith.constant 1 : index
    %c0_58 = arith.constant 0 : index
    %119 = vector.load %arg7[%c1_57, %c0_58] : memref<2x128xf32, #tpu.memory_space<vmem>>, vector<1x128xf32>
    %120 = vector.shape_cast %119 : vector<1x128xf32> to vector<128xf32>
    %121 = vector.shape_cast %120 : vector<128xf32> to vector<1x128xf32>
    %122 = vector.broadcast %121 : vector<1x128xf32> to vector<16x128xf32>
    %123 = arith.addf %118, %122 : vector<16x128xf32>
    %cst_59 = arith.constant dense<0.000000e+00> : vector<128xf32>
    %124 = vector.multi_reduction <add>, %123, %cst_59 [0] : vector<16x128xf32> to vector<128xf32>
    %125 = vector.shape_cast %124 : vector<128xf32> to vector<1x128xf32>
    %cst_60 = arith.constant 1.600000e+01 : f32
    %126 = vector.broadcast %cst_60 : f32 to vector<1x128xf32>
    %127 = arith.divf %125, %126 : vector<1x128xf32>
    %c0_61 = arith.constant 0 : index
    %c0_62 = arith.constant 0 : index
    %128 = vector.load %arg8[%c0_61, %c0_62] : memref<128x2xf32, #tpu.memory_space<vmem>>, vector<128x2xf32>
    %cst_63 = arith.constant dense<0.000000e+00> : vector<1x2xf32>
    %129 = tpu.matmul %127, %128, %cst_63 {dimension_numbers = #tpu.dot_dimension_numbers<[1], [0], [0], [1], [0, 0, 1, 1], [], []>} : vector<1x128xf32>, vector<128x2xf32>, vector<1x2xf32> -> vector<1x2xf32>
    %c0_64 = arith.constant 0 : index
    %c0_65 = arith.constant 0 : index
    %130 = vector.load %arg9[%c0_64, %c0_65] : memref<2x2xf32, #tpu.memory_space<vmem>>, vector<1x2xf32>
    %131 = vector.shape_cast %130 : vector<1x2xf32> to vector<2xf32>
    %132 = vector.shape_cast %131 : vector<2xf32> to vector<1x2xf32>
    %133 = arith.mulf %129, %132 : vector<1x2xf32>
    %c1_66 = arith.constant 1 : index
    %c0_67 = arith.constant 0 : index
    %134 = vector.load %arg9[%c1_66, %c0_67] : memref<2x2xf32, #tpu.memory_space<vmem>>, vector<1x2xf32>
    %135 = vector.shape_cast %134 : vector<1x2xf32> to vector<2xf32>
    %136 = vector.shape_cast %135 : vector<2xf32> to vector<1x2xf32>
    %137 = arith.addf %133, %136 : vector<1x2xf32>
    %cst_68 = arith.constant 0.000000e+00 : f32
    %138 = vector.broadcast %cst_68 : f32 to vector<1x2xf32>
    %139 = arith.maximumf %137, %138 : vector<1x2xf32>
    %c0_69 = arith.constant 0 : index
    %c0_70 = arith.constant 0 : index
    %140 = vector.load %arg10[%c0_69, %c0_70] : memref<2x128xf32, #tpu.memory_space<vmem>>, vector<2x128xf32>
    %cst_71 = arith.constant dense<0.000000e+00> : vector<1x128xf32>
    %141 = tpu.matmul %139, %140, %cst_71 {dimension_numbers = #tpu.dot_dimension_numbers<[1], [0], [0], [1], [0, 0, 1, 1], [], []>} : vector<1x2xf32>, vector<2x128xf32>, vector<1x128xf32> -> vector<1x128xf32>
    %c0_72 = arith.constant 0 : index
    %c0_73 = arith.constant 0 : index
    %142 = vector.load %arg11[%c0_72, %c0_73] : memref<2x128xf32, #tpu.memory_space<vmem>>, vector<1x128xf32>
    %143 = vector.shape_cast %142 : vector<1x128xf32> to vector<128xf32>
    %144 = vector.shape_cast %143 : vector<128xf32> to vector<1x128xf32>
    %145 = arith.mulf %141, %144 : vector<1x128xf32>
    %c1_74 = arith.constant 1 : index
    %c0_75 = arith.constant 0 : index
    %146 = vector.load %arg11[%c1_74, %c0_75] : memref<2x128xf32, #tpu.memory_space<vmem>>, vector<1x128xf32>
    %147 = vector.shape_cast %146 : vector<1x128xf32> to vector<128xf32>
    %148 = vector.shape_cast %147 : vector<128xf32> to vector<1x128xf32>
    %149 = arith.addf %145, %148 : vector<1x128xf32>
    %cst_76 = arith.constant 3.000000e+00 : f32
    %150 = vector.broadcast %cst_76 : f32 to vector<1x128xf32>
    %151 = arith.addf %149, %150 : vector<1x128xf32>
    %cst_77 = arith.constant 0.000000e+00 : f32
    %cst_78 = arith.constant 6.000000e+00 : f32
    %152 = vector.broadcast %cst_77 : f32 to vector<1x128xf32>
    %153 = arith.maximumf %152, %151 : vector<1x128xf32>
    %154 = vector.broadcast %cst_78 : f32 to vector<1x128xf32>
    %155 = arith.minimumf %154, %153 : vector<1x128xf32>
    %cst_79 = arith.constant 0.166666672 : f32
    %156 = vector.broadcast %cst_79 : f32 to vector<1x128xf32>
    %157 = arith.mulf %155, %156 : vector<1x128xf32>
    %158 = vector.broadcast %157 : vector<1x128xf32> to vector<16x128xf32>
    %159 = arith.mulf %123, %158 : vector<16x128xf32>
    %160 = arith.addf %159, %14 : vector<16x128xf32>
    %c0_80 = arith.constant 0 : index
    %c0_81 = arith.constant 0 : index
    %c0_82 = arith.constant 0 : index
    %161 = vector.load %arg12[%c0_80, %c0_81, %c0_82] : memref<1x16x128xf32, #tpu.memory_space<vmem>>, vector<1x16x128xf32>
    %162 = vector.shape_cast %161 : vector<1x16x128xf32> to vector<16x128xf32>
    %163 = vector.shape_cast %160 : vector<16x128xf32> to vector<1x16x128xf32>
    tpu.vector_store %arg12[%c0_80, %c0_81, %c0_82], %163 {strides = array<i32>} : memref<1x16x128xf32, #tpu.memory_space<vmem>>, vector<1x16x128xf32>,
    return
  }
  func.func @transform_0(%arg0: i32) -> (i32, i32, i32) {
    %c0_i32 = arith.constant 0 : i32
    %c0_i32_0 = arith.constant 0 : i32
    %c0_i32_1 = arith.constant 0 : i32
    return %arg0, %c0_i32, %c0_i32_0 : i32, i32, i32
  }
  func.func @transform_1(%arg0: i32) -> (i32, i32) {
    %c0_i32 = arith.constant 0 : i32
    %c0_i32_0 = arith.constant 0 : i32
    %c0_i32_1 = arith.constant 0 : i32
    return %c0_i32, %c0_i32_0 : i32, i32
  }
  func.func @transform_2(%arg0: i32) -> (i32, i32) {
    %c0_i32 = arith.constant 0 : i32
    %c0_i32_0 = arith.constant 0 : i32
    %c0_i32_1 = arith.constant 0 : i32
    return %c0_i32, %c0_i32_0 : i32, i32
  }
  func.func @transform_3(%arg0: i32) -> (i32, i32) {
    %c0_i32 = arith.constant 0 : i32
    %c0_i32_0 = arith.constant 0 : i32
    %c0_i32_1 = arith.constant 0 : i32
    return %c0_i32, %c0_i32_0 : i32, i32
  }
  func.func @transform_4(%arg0: i32) -> (i32, i32) {
    %c0_i32 = arith.constant 0 : i32
    %c0_i32_0 = arith.constant 0 : i32
    %c0_i32_1 = arith.constant 0 : i32
    return %c0_i32, %c0_i32_0 : i32, i32
  }
  func.func @transform_5(%arg0: i32) -> (i32, i32) {
    %c0_i32 = arith.constant 0 : i32
    %c0_i32_0 = arith.constant 0 : i32
    %c0_i32_1 = arith.constant 0 : i32
    return %c0_i32, %c0_i32_0 : i32, i32
  }
  func.func @transform_6(%arg0: i32) -> (i32, i32) {
    %c0_i32 = arith.constant 0 : i32
    %c0_i32_0 = arith.constant 0 : i32
    %c0_i32_1 = arith.constant 0 : i32
    return %c0_i32, %c0_i32_0 : i32, i32
  }
  func.func @transform_7(%arg0: i32) -> (i32, i32) {
    %c0_i32 = arith.constant 0 : i32
    %c0_i32_0 = arith.constant 0 : i32
    %c0_i32_1 = arith.constant 0 : i32
    return %c0_i32, %c0_i32_0 : i32, i32
  }
  func.func @transform_8(%arg0: i32) -> (i32, i32) {
    %c0_i32 = arith.constant 0 : i32
    %c0_i32_0 = arith.constant 0 : i32
    %c0_i32_1 = arith.constant 0 : i32
    return %c0_i32, %c0_i32_0 : i32, i32
  }
  func.func @transform_9(%arg0: i32) -> (i32, i32) {
    %c0_i32 = arith.constant 0 : i32
    %c0_i32_0 = arith.constant 0 : i32
    %c0_i32_1 = arith.constant 0 : i32
    return %c0_i32, %c0_i32_0 : i32, i32
  }
  func.func @transform_10(%arg0: i32) -> (i32, i32) {
    %c0_i32 = arith.constant 0 : i32
    %c0_i32_0 = arith.constant 0 : i32
    %c0_i32_1 = arith.constant 0 : i32
    return %c0_i32, %c0_i32_0 : i32, i32
  }
  func.func @transform_11(%arg0: i32) -> (i32, i32, i32) {
    %c0_i32 = arith.constant 0 : i32
    %c0_i32_0 = arith.constant 0 : i32
    %c0_i32_1 = arith.constant 0 : i32
    return %arg0, %c0_i32, %c0_i32_0 : i32, i32, i32
  }
}

</mosaic_0001>

<llo_original>
// kernel: tpu_custom_call.1
$region0: #{tpu_custom_call.1}
  #allocation0 [shape = 'u32[]', space=smem, size = 0x4, offset = 0x4, fixed_abs, tag = 'smem constant byte address 0x4 - core index']
  #allocation1 [shape = 'u32[144,128]{1,0:T(1,128)}', space=vmem, size = 0x12000, scoped, tag = 'internal scratch']
  #allocation2 [shape = 'f32[25,288]{1,0:T(8,128)}', space=vmem, size = 0xc000, scoped, tag = 'scratch operand']
  %s0 = inlined_call_operand.vmem [shape: f32[2,16,64], index: 0, kind: input, shape index: {}]
  %s1 = inlined_call_operand.hbm [shape: f32[64,416], index: 1, kind: input, shape index: {}]
  %s2 = inlined_call_operand.vmem [shape: f32[2,416], index: 2, kind: input, shape index: {}]
  %s3 = inlined_call_operand.vmem [shape: f32[9,256], index: 3, kind: input, shape index: {}]
  %s4 = inlined_call_operand.vmem [shape: f32[2,256], index: 4, kind: input, shape index: {}]
  %s5 = inlined_call_operand.hbm [shape: f32[256,128], index: 5, kind: input, shape index: {}]
  %s6 = inlined_call_operand.vmem [shape: f32[2,128], index: 6, kind: input, shape index: {}]
  %s7 = inlined_call_operand.vmem [shape: f32[128,2], index: 7, kind: input, shape index: {}]
  %s8 = inlined_call_operand.vmem [shape: f32[2,2], index: 8, kind: input, shape index: {}]
  %s9 = inlined_call_operand.vmem [shape: f32[2,128], index: 9, kind: input, shape index: {}]
  %s10 = inlined_call_operand.vmem [shape: f32[2,128], index: 10, kind: input, shape index: {}]
  %s11 = inlined_call_operand.hbm [shape: f32[2,16,128], index: 11, kind: output, shape index: {}]
  %s12 = sld [smem:[#allocation0]]
  $region85: #{tpu_custom_call.1} parent=0
    _
  %s14 = ssub.s32 1, %s12
  %s15 = scalar_select 0, %s14, %s12
  $region1: #{tpu_custom_call.1} parent=0
    #allocation3 [shape = 'u8[131072]{0}', space=vmem, size = 0x20000, scoped, tag = 'input window, operand 1, single buffered']
    #allocation4 [shape = 's32[2]{0}', space=sflag, size = 0x8, scoped, tag = 'scoped memory for tpu_custom_call.1']
    #allocation5 [shape = 's32[2]{0}', space=sflag, size = 0x8, scoped, tag = 'scoped memory for tpu_custom_call.1']
    #allocation6 [shape = 'u8[131072]{0}', space=vmem, size = 0x20000, scoped, tag = 'input window, operand 5, single buffered']
    #allocation7 [shape = 's32[1]{0}', space=sflag, size = 0x4, scoped, tag = 'scoped memory for tpu_custom_call.1']
    #allocation8 [shape = 'u8[16384]{0}', space=vmem, size = 0x4000, scoped, tag = 'output window, operand 0']
    %16 = vsyncpa [#allocation4], 0
    %17 = vsyncpa [#allocation7], 0
    %18 = vsyncpa [#allocation5], 0
    %s19 = scalar_lea.sflag [#allocation5], 1
    %20 = vsyncpa %s19, 0
    loop: start=0, step=1, limit=4
    $region2: #{tpu_custom_call.1} parent=1 // loop_pre_header
      _
    $region3: #{tpu_custom_call.1} parent=1 // loop_header
      %s22 = sphi 0, %s26
      %p23 = scmp.ge.s32.totalorder %s22, 4
      %s32 = sphi 0, %s34
      %s35 = sphi 0, %s32
      %s36 = sphi 0, %s35
      %s52 = sphi 0, %s36
      %s56 = sphi 0, %s56
      %s58 = sphi 0, %s56
      %s59 = sphi 0, %s58
      %s73 = sphi 0, %s59
      %s77 = sphi 0, %s77
      %s79 = sphi 0, %s77
      %s80 = sphi 0, %s79
      %s94 = sphi 0, %s80
      %s98 = sphi 0, %s98
      %s100 = sphi 0, %s98
      %s101 = sphi 0, %s100
      %s115 = sphi 0, %s101
      %s119 = sphi 0, %s119
      %s121 = sphi 0, %s119
      %s122 = sphi 0, %s121
      %s136 = sphi 0, %s122
      %s140 = sphi 0, %s140
      %s142 = sphi 0, %s140
      %s143 = sphi 0, %s142
      %s157 = sphi 0, %s143
      %s161 = sphi 0, %s161
      %s163 = sphi 0, %s161
      %s164 = sphi 0, %s163
      %s178 = sphi 0, %s164
      %s182 = sphi 0, %s182
      %s184 = sphi 0, %s182
      %s185 = sphi 0, %s184
      %s199 = sphi 0, %s185
      %s203 = sphi 0, %s203
      %s205 = sphi 0, %s203
      %s206 = sphi 0, %s205
      %s220 = sphi 0, %s206
      %s224 = sphi 0, %s224
      %s226 = sphi 0, %s224
      %s227 = sphi 0, %s226
      %s241 = sphi 0, %s227
      %s245 = sphi 0, %s245
      %s247 = sphi 0, %s245
      %s248 = sphi 0, %s247
      %s262 = sphi 0, %s248
      %s268 = sphi 0, %s270
      %s271 = sphi 0, %s268
      %s272 = sphi 0, %s271
      %s288 = sphi 0, %s272
    $region4: #{tpu_custom_call.1} parent=1 // loop_header_branch
      %25 = sbr.rel (%p23) target = $region8
    $region5: #{tpu_custom_call.1} parent=1 // loop_body
      %s27 = ssub.s32 %s22, 1
      %s28 = ssub.s32 %s22, 2
      %s29 = sadd.s32 %s22, 1
      %s30 = ssub.s32 %s22, %s29
      %p31 = scmp.eq.s32.totalorder %s30, 0
      %s33 = sadd.s32 %s32, 1
      %s34 = scalar_select %p31, %s32, %s33
      %p37 = pneg %p31
      %p38 = scmp.eq.s32.totalorder %s22, 1
      %p39 = por %p37, %p38
      %p40 = scmp.ne.s32.totalorder %s32, %s35
      %p41 = scmp.eq.s32.totalorder %s22, 0
      %p42 = por %p40, %p41
      %p43 = scmp.ne.s32.totalorder %s32, %s35
      %p44 = scmp.eq.s32.totalorder %s27, 1
      %p45 = por %p43, %p44
      %p46 = scmp.ne.s32.totalorder %s35, %s36
      %p47 = scmp.eq.s32.totalorder %s27, 0
      %p48 = por %p46, %p47
      %p49 = scmp.ne.s32.totalorder %s35, %s36
      %p50 = scmp.eq.s32.totalorder %s28, 1
      %p51 = por %p49, %p50
      %p53 = scmp.ne.s32.totalorder %s36, %s52
      %p54 = scmp.eq.s32.totalorder %s28, 0
      %p55 = por %p53, %p54
      %s57 = sadd.s32 %s56, 1
      %p60 = scmp.eq.s32.totalorder %s22, 1
      %p61 = scmp.ne.s32.totalorder %s56, %s58
      %p62 = scmp.eq.s32.totalorder %s22, 0
      %p63 = por %p61, %p62
      %p64 = scmp.ne.s32.totalorder %s56, %s58
      %p65 = scmp.eq.s32.totalorder %s27, 1
      %p66 = por %p64, %p65
      %p67 = scmp.ne.s32.totalorder %s58, %s59
      %p68 = scmp.eq.s32.totalorder %s27, 0
      %p69 = por %p67, %p68
      %p70 = scmp.ne.s32.totalorder %s58, %s59
      %p71 = scmp.eq.s32.totalorder %s28, 1
      %p72 = por %p70, %p71
      %p74 = scmp.ne.s32.totalorder %s59, %s73
      %p75 = scmp.eq.s32.totalorder %s28, 0
      %p76 = por %p74, %p75
      %s78 = sadd.s32 %s77, 1
      %p81 = scmp.eq.s32.totalorder %s22, 1
      %p82 = scmp.ne.s32.totalorder %s77, %s79
      %p83 = scmp.eq.s32.totalorder %s22, 0
      %p84 = por %p82, %p83
      %p85 = scmp.ne.s32.totalorder %s77, %s79
      %p86 = scmp.eq.s32.totalorder %s27, 1
      %p87 = por %p85, %p86
      %p88 = scmp.ne.s32.totalorder %s79, %s80
      %p89 = scmp.eq.s32.totalorder %s27, 0
      %p90 = por %p88, %p89
      %p91 = scmp.ne.s32.totalorder %s79, %s80
      %p92 = scmp.eq.s32.totalorder %s28, 1
      %p93 = por %p91, %p92
      %p95 = scmp.ne.s32.totalorder %s80, %s94
      %p96 = scmp.eq.s32.totalorder %s28, 0
      %p97 = por %p95, %p96
      %s99 = sadd.s32 %s98, 1
      %p102 = scmp.eq.s32.totalorder %s22, 1
      %p103 = scmp.ne.s32.totalorder %s98, %s100
      %p104 = scmp.eq.s32.totalorder %s22, 0
      %p105 = por %p103, %p104
      %p106 = scmp.ne.s32.totalorder %s98, %s100
      %p107 = scmp.eq.s32.totalorder %s27, 1
      %p108 = por %p106, %p107
      %p109 = scmp.ne.s32.totalorder %s100, %s101
      %p110 = scmp.eq.s32.totalorder %s27, 0
      %p111 = por %p109, %p110
      %p112 = scmp.ne.s32.totalorder %s100, %s101
      %p113 = scmp.eq.s32.totalorder %s28, 1
      %p114 = por %p112, %p113
      %p116 = scmp.ne.s32.totalorder %s101, %s115
      %p117 = scmp.eq.s32.totalorder %s28, 0
      %p118 = por %p116, %p117
      %s120 = sadd.s32 %s119, 1
      %p123 = scmp.eq.s32.totalorder %s22, 1
      %p124 = scmp.ne.s32.totalorder %s119, %s121
      %p125 = scmp.eq.s32.totalorder %s22, 0
      %p126 = por %p124, %p125
      %p127 = scmp.ne.s32.totalorder %s119, %s121
      %p128 = scmp.eq.s32.totalorder %s27, 1
      %p129 = por %p127, %p128
      %p130 = scmp.ne.s32.totalorder %s121, %s122
      %p131 = scmp.eq.s32.totalorder %s27, 0
      %p132 = por %p130, %p131
      %p133 = scmp.ne.s32.totalorder %s121, %s122
      %p134 = scmp.eq.s32.totalorder %s28, 1
      %p135 = por %p133, %p134
      %p137 = scmp.ne.s32.totalorder %s122, %s136
      %p138 = scmp.eq.s32.totalorder %s28, 0
      %p139 = por %p137, %p138
      %s141 = sadd.s32 %s140, 1
      %p144 = scmp.eq.s32.totalorder %s22, 1
      %p145 = scmp.ne.s32.totalorder %s140, %s142
      %p146 = scmp.eq.s32.totalorder %s22, 0
      %p147 = por %p145, %p146
      %p148 = scmp.ne.s32.totalorder %s140, %s142
      %p149 = scmp.eq.s32.totalorder %s27, 1
      %p150 = por %p148, %p149
      %p151 = scmp.ne.s32.totalorder %s142, %s143
      %p152 = scmp.eq.s32.totalorder %s27, 0
      %p153 = por %p151, %p152
      %p154 = scmp.ne.s32.totalorder %s142, %s143
      %p155 = scmp.eq.s32.totalorder %s28, 1
      %p156 = por %p154, %p155
      %p158 = scmp.ne.s32.totalorder %s143, %s157
      %p159 = scmp.eq.s32.totalorder %s28, 0
      %p160 = por %p158, %p159
      %s162 = sadd.s32 %s161, 1
      %p165 = scmp.eq.s32.totalorder %s22, 1
      %p166 = scmp.ne.s32.totalorder %s161, %s163
      %p167 = scmp.eq.s32.totalorder %s22, 0
      %p168 = por %p166, %p167
      %p169 = scmp.ne.s32.totalorder %s161, %s163
      %p170 = scmp.eq.s32.totalorder %s27, 1
      %p171 = por %p169, %p170
      %p172 = scmp.ne.s32.totalorder %s163, %s164
      %p173 = scmp.eq.s32.totalorder %s27, 0
      %p174 = por %p172, %p173
      %p175 = scmp.ne.s32.totalorder %s163, %s164
      %p176 = scmp.eq.s32.totalorder %s28, 1
      %p177 = por %p175, %p176
      %p179 = scmp.ne.s32.totalorder %s164, %s178
      %p180 = scmp.eq.s32.totalorder %s28, 0
      %p181 = por %p179, %p180
      %s183 = sadd.s32 %s182, 1
      %p186 = scmp.eq.s32.totalorder %s22, 1
      %p187 = scmp.ne.s32.totalorder %s182, %s184
      %p188 = scmp.eq.s32.totalorder %s22, 0
      %p189 = por %p187, %p188
      %p190 = scmp.ne.s32.totalorder %s182, %s184
      %p191 = scmp.eq.s32.totalorder %s27, 1
      %p192 = por %p190, %p191
      %p193 = scmp.ne.s32.totalorder %s184, %s185
      %p194 = scmp.eq.s32.totalorder %s27, 0
      %p195 = por %p193, %p194
      %p196 = scmp.ne.s32.totalorder %s184, %s185
      %p197 = scmp.eq.s32.totalorder %s28, 1
      %p198 = por %p196, %p197
      %p200 = scmp.ne.s32.totalorder %s185, %s199
      %p201 = scmp.eq.s32.totalorder %s28, 0
      %p202 = por %p200, %p201
      %s204 = sadd.s32 %s203, 1
      %p207 = scmp.eq.s32.totalorder %s22, 1
      %p208 = scmp.ne.s32.totalorder %s203, %s205
      %p209 = scmp.eq.s32.totalorder %s22, 0
      %p210 = por %p208, %p209
      %p211 = scmp.ne.s32.totalorder %s203, %s205
      %p212 = scmp.eq.s32.totalorder %s27, 1
      %p213 = por %p211, %p212
      %p214 = scmp.ne.s32.totalorder %s205, %s206
      %p215 = scmp.eq.s32.totalorder %s27, 0
      %p216 = por %p214, %p215
      %p217 = scmp.ne.s32.totalorder %s205, %s206
      %p218 = scmp.eq.s32.totalorder %s28, 1
      %p219 = por %p217, %p218
      %p221 = scmp.ne.s32.totalorder %s206, %s220
      %p222 = scmp.eq.s32.totalorder %s28, 0
      %p223 = por %p221, %p222
      %s225 = sadd.s32 %s224, 1
      %p228 = scmp.eq.s32.totalorder %s22, 1
      %p229 = scmp.ne.s32.totalorder %s224, %s226
      %p230 = scmp.eq.s32.totalorder %s22, 0
      %p231 = por %p229, %p230
      %p232 = scmp.ne.s32.totalorder %s224, %s226
      %p233 = scmp.eq.s32.totalorder %s27, 1
      %p234 = por %p232, %p233
      %p235 = scmp.ne.s32.totalorder %s226, %s227
      %p236 = scmp.eq.s32.totalorder %s27, 0
      %p237 = por %p235, %p236
      %p238 = scmp.ne.s32.totalorder %s226, %s227
      %p239 = scmp.eq.s32.totalorder %s28, 1
      %p240 = por %p238, %p239
      %p242 = scmp.ne.s32.totalorder %s227, %s241
      %p243 = scmp.eq.s32.totalorder %s28, 0
      %p244 = por %p242, %p243
      %s246 = sadd.s32 %s245, 1
      %p249 = scmp.eq.s32.totalorder %s22, 1
      %p250 = scmp.ne.s32.totalorder %s245, %s247
      %p251 = scmp.eq.s32.totalorder %s22, 0
      %p252 = por %p250, %p251
      %p253 = scmp.ne.s32.totalorder %s245, %s247
      %p254 = scmp.eq.s32.totalorder %s27, 1
      %p255 = por %p253, %p254
      %p256 = scmp.ne.s32.totalorder %s247, %s248
      %p257 = scmp.eq.s32.totalorder %s27, 0
      %p258 = por %p256, %p257
      %p259 = scmp.ne.s32.totalorder %s247, %s248
      %p260 = scmp.eq.s32.totalorder %s28, 1
      %p261 = por %p259, %p260
      %p263 = scmp.ne.s32.totalorder %s248, %s262
      %p264 = scmp.eq.s32.totalorder %s28, 0
      %p265 = por %p263, %p264
      %s266 = ssub.s32 %s22, %s29
      %p267 = scmp.eq.s32.totalorder %s266, 0
      %s269 = sadd.s32 %s268, 1
      %s270 = scalar_select %p267, %s268, %s269
      %p273 = pneg %p267
      %p274 = scmp.eq.s32.totalorder %s22, 1
      %p275 = por %p273, %p274
      %p276 = scmp.ne.s32.totalorder %s268, %s271
      %p277 = scmp.eq.s32.totalorder %s22, 0
      %p278 = por %p276, %p277
      %p279 = scmp.ne.s32.totalorder %s268, %s271
      %p280 = scmp.eq.s32.totalorder %s27, 1
      %p281 = por %p279, %p280
      %p282 = scmp.ne.s32.totalorder %s271, %s272
      %p283 = scmp.eq.s32.totalorder %s27, 0
      %p284 = por %p282, %p283
      %p285 = scmp.ne.s32.totalorder %s271, %s272
      %p286 = scmp.eq.s32.totalorder %s28, 1
      %p287 = por %p285, %p286
      %p289 = scmp.ne.s32.totalorder %s272, %s288
      %p290 = scmp.eq.s32.totalorder %s28, 0
      %p291 = por %p289, %p290
      %p292 = scmp.le.s32.totalorder 1, %s22
      %p293 = scmp.lt.s32.totalorder %s22, 3
      %p294 = pnand %p292, %p293
      %p295 = pneg %p294
      // Predicated region
      $region9: #{tpu_custom_call.1} parent=5 // pred_check
        _
      $region10: #{tpu_custom_call.1} parent=5 // pred_check_branch
        %297 = sbr.rel (%p294) target = $region12
      $region11: #{tpu_custom_call.1} parent=5 // pred_region
        %s298 = ssub.s32 %s22, 1
        // Predicated region
        $region13: #{tpu_custom_call.1} parent=11 // pred_check
          %p299 = pneg %p69
        $region14: #{tpu_custom_call.1} parent=11 // pred_check_branch
          %301 = sbr.rel (%p299) target = $region16
        $region15: #{tpu_custom_call.1} parent=11 // pred_region
          %s303 = ssub.s32 4096, 4096
          %304 = vsyncadd [#allocation4], %s303
          %s305 = sshll.u32 [#allocation3], 4
          %s306 = int_to_ptr.vmem [resolvable:$true] %s305
          %311 = dma.hbm_to_vmem [thread:$0]  %s1, 4096, %s306, [#allocation4], 512, 512, 32
        $region16: #{tpu_custom_call.1} parent=11 // pred_fallthru
          _
        // Predicated region
        $region17: #{tpu_custom_call.1} parent=11 // pred_check
          %p312 = pneg %p90
        $region18: #{tpu_custom_call.1} parent=11 // pred_check_branch
          %314 = sbr.rel (%p312) target = $region20
        $region19: #{tpu_custom_call.1} parent=11 // pred_region
          _
        $region20: #{tpu_custom_call.1} parent=11 // pred_fallthru
          _
        // Predicated region
        $region21: #{tpu_custom_call.1} parent=11 // pred_check
          %p315 = pneg %p111
        $region22: #{tpu_custom_call.1} parent=11 // pred_check_branch
          %317 = sbr.rel (%p315) target = $region24
        $region23: #{tpu_custom_call.1} parent=11 // pred_region
          _
        $region24: #{tpu_custom_call.1} parent=11 // pred_fallthru
          _
        // Predicated region
        $region25: #{tpu_custom_call.1} parent=11 // pred_check
          %p318 = pneg %p132
        $region26: #{tpu_custom_call.1} parent=11 // pred_check_branch
          %320 = sbr.rel (%p318) target = $region28
        $region27: #{tpu_custom_call.1} parent=11 // pred_region
          _
        $region28: #{tpu_custom_call.1} parent=11 // pred_fallthru
          _
        // Predicated region
        $region29: #{tpu_custom_call.1} parent=11 // pred_check
          %p321 = pneg %p153
        $region30: #{tpu_custom_call.1} parent=11 // pred_check_branch
          %323 = sbr.rel (%p321) target = $region32
        $region31: #{tpu_custom_call.1} parent=11 // pred_region
          %s325 = ssub.s32 4096, 4096
          %326 = vsyncadd [#allocation7], %s325
          %s327 = sshll.u32 [#allocation6], 4
          %s328 = int_to_ptr.vmem [resolvable:$true] %s327
          %333 = dma.hbm_to_vmem [thread:$0]  %s5, 4096, %s328, [#allocation7], 128, 128, 8
        $region32: #{tpu_custom_call.1} parent=11 // pred_fallthru
          _
        // Predicated region
        $region33: #{tpu_custom_call.1} parent=11 // pred_check
          %p334 = pneg %p174
        $region34: #{tpu_custom_call.1} parent=11 // pred_check_branch
          %336 = sbr.rel (%p334) target = $region36
        $region35: #{tpu_custom_call.1} parent=11 // pred_region
          _
        $region36: #{tpu_custom_call.1} parent=11 // pred_fallthru
          _
        // Predicated region
        $region37: #{tpu_custom_call.1} parent=11 // pred_check
          %p337 = pneg %p195
        $region38: #{tpu_custom_call.1} parent=11 // pred_check_branch
          %339 = sbr.rel (%p337) target = $region40
        $region39: #{tpu_custom_call.1} parent=11 // pred_region
          _
        $region40: #{tpu_custom_call.1} parent=11 // pred_fallthru
          _
        // Predicated region
        $region41: #{tpu_custom_call.1} parent=11 // pred_check
          %p340 = pneg %p216
        $region42: #{tpu_custom_call.1} parent=11 // pred_check_branch
          %342 = sbr.rel (%p340) target = $region44
        $region43: #{tpu_custom_call.1} parent=11 // pred_region
          _
        $region44: #{tpu_custom_call.1} parent=11 // pred_fallthru
          _
        // Predicated region
        $region45: #{tpu_custom_call.1} parent=11 // pred_check
          %p343 = pneg %p237
        $region46: #{tpu_custom_call.1} parent=11 // pred_check_branch
          %345 = sbr.rel (%p343) target = $region48
        $region47: #{tpu_custom_call.1} parent=11 // pred_region
          _
        $region48: #{tpu_custom_call.1} parent=11 // pred_fallthru
          _
        // Predicated region
        $region49: #{tpu_custom_call.1} parent=11 // pred_check
          %p346 = pneg %p258
        $region50: #{tpu_custom_call.1} parent=11 // pred_check_branch
          %348 = sbr.rel (%p346) target = $region52
        $region51: #{tpu_custom_call.1} parent=11 // pred_region
          _
        $region52: #{tpu_custom_call.1} parent=11 // pred_fallthru
          _
      $region12: #{tpu_custom_call.1} parent=5 // pred_fallthru
        _
      %p349 = scmp.lt.s32.totalorder %s22, 2
      // Predicated region
      $region53: #{tpu_custom_call.1} parent=5 // pred_check
        %p350 = pneg %p349
      $region54: #{tpu_custom_call.1} parent=5 // pred_check_branch
        %352 = sbr.rel (%p350) target = $region56
      $region55: #{tpu_custom_call.1} parent=5 // pred_region
        // Predicated region
        $region57: #{tpu_custom_call.1} parent=55 // pred_check
          %p353 = pneg %p42
        $region58: #{tpu_custom_call.1} parent=55 // pred_check_branch
          %355 = sbr.rel (%p353) target = $region60
        $region59: #{tpu_custom_call.1} parent=55 // pred_region
          %p356 = scmp.lt.s32.totalorder %s22, 1
          %s357 = scalar_select %p356, %s22, 1
          %s358 = smul.addr %s357, 2
          %s359 = smul.addr %s358, 8
          %s360 = scalar_lea.vmem %s0, %s359
        $region60: #{tpu_custom_call.1} parent=55 // pred_fallthru
          _
      $region56: #{tpu_custom_call.1} parent=5 // pred_fallthru
        _
      %p361 = scmp.le.s32.totalorder 1, %s22
      %p362 = scmp.lt.s32.totalorder %s22, 3
      %p363 = pnand %p361, %p362
      %p364 = pneg %p363
      // Predicated region
      $region61: #{tpu_custom_call.1} parent=5 // pred_check
        _
      $region62: #{tpu_custom_call.1} parent=5 // pred_check_branch
        %366 = sbr.rel (%p363) target = $region64
      $region63: #{tpu_custom_call.1} parent=5 // pred_region
        %s367 = ssub.s32 %s22, 1
        // Predicated region
        $region65: #{tpu_custom_call.1} parent=63 // pred_check
          %p368 = pneg %p69
        $region66: #{tpu_custom_call.1} parent=63 // pred_check_branch
          %370 = sbr.rel (%p368) target = $region68
        $region67: #{tpu_custom_call.1} parent=63 // pred_region
          %371 = dma.done [#allocation4], 4096
        $region68: #{tpu_custom_call.1} parent=63 // pred_fallthru
          _
        // Predicated region
        $region69: #{tpu_custom_call.1} parent=63 // pred_check
          %p372 = pneg %p153
        $region70: #{tpu_custom_call.1} parent=63 // pred_check_branch
          %374 = sbr.rel (%p372) target = $region72
        $region71: #{tpu_custom_call.1} parent=63 // pred_region
          %375 = dma.done [#allocation7], 4096
        $region72: #{tpu_custom_call.1} parent=63 // pred_fallthru
          _
        %p376 = scmp.lt.s32.totalorder %s27, 1
        %s377 = scalar_select %p376, %s27, 1
        %s378 = smul.addr %s377, 2
        %s379 = smul.addr %s378, 8
        %s380 = scalar_lea.vmem %s0, %s379
        %p381 = pneg %p48
        %p382 = pneg %p45
        %p383 = pneg %p69
        %p384 = pneg %p66
        %p385 = pneg %p90
        %p386 = pneg %p87
        %p387 = pneg %p111
        %p388 = pneg %p108
        %p389 = pneg %p132
        %p390 = pneg %p129
        %p391 = pneg %p153
        %p392 = pneg %p150
        %p393 = pneg %p174
        %p394 = pneg %p171
        %p395 = pneg %p195
        %p396 = pneg %p192
        %p397 = pneg %p216
        %p398 = pneg %p213
        %p399 = pneg %p237
        %p400 = pneg %p234
        %p401 = pneg %p258
        %p402 = pneg %p255
        %p403 = pneg %p284
        %p404 = pneg %p281
        %s405 = sand.u32 %s271, 1
        %s406 = scalar_lea.sflag [#allocation5], %s405
        %s407 = sand.u32 %s271, 1
        %s408 = smul.addr %s407, 16
        %s409 = scalar_lea.vmem [#allocation8], %s408
        %p410 = scmp.lt.s32.totalorder %s27, 1
        %s411 = scalar_select %p410, %s27, 1
        %s412 = smul.addr %s411, 2
        %s413 = smul.addr %s412, 8
        %s414 = scalar_lea.vmem %s0, %s413
        %v415 = vld [vmem:[%s414] sm:$0xff]
        %v416 = vld [vmem:[%s414 + $0x8] sm:$0xff]
        %v417 = vld [vmem:[#allocation3] sm:$0xff]
        %v418 = vld [vmem:[#allocation3 + $0x8] sm:$0xff]
        %v419 = vld [vmem:[#allocation3 + $0x10] sm:$0xff]
        %v420 = vld [vmem:[#allocation3 + $0x18] sm:$0xff]
        %v421 = vld [vmem:[#allocation3 + $0x20] sm:$0xff]
        %v422 = vld [vmem:[#allocation3 + $0x28] sm:$0xff]
        %v423 = vld [vmem:[#allocation3 + $0x30] sm:$0xff]
        %v424 = vld [vmem:[#allocation3 + $0x38] sm:$0xff]
        %v425 = vld [vmem:[#allocation3 + $0x40] sm:$0xff]
        %v426 = vld [vmem:[#allocation3 + $0x48] sm:$0xff]
        %v427 = vld [vmem:[#allocation3 + $0x50] sm:$0xff]
        %v428 = vld [vmem:[#allocation3 + $0x58] sm:$0xff]
        %v429 = vld [vmem:[#allocation3 + $0x60] sm:$0xff]
        %v430 = vld [vmem:[#allocation3 + $0x68] sm:$0xff]
        %v431 = vld [vmem:[#allocation3 + $0x70] sm:$0xff]
        %v432 = vld [vmem:[#allocation3 + $0x78] sm:$0xff]
        %v433 = vld [vmem:[#allocation3 + $0x80] sm:$0xff]
        %v434 = vld [vmem:[#allocation3 + $0x88] sm:$0xff]
        %v435 = vld [vmem:[#allocation3 + $0x90] sm:$0xff]
        %v436 = vld [vmem:[#allocation3 + $0x98] sm:$0xff]
        %v437 = vld [vmem:[#allocation3 + $0xa0] sm:$0xff]
        %v438 = vld [vmem:[#allocation3 + $0xa8] sm:$0xff]
        %v439 = vld [vmem:[#allocation3 + $0xb0] sm:$0xff]
        %v440 = vld [vmem:[#allocation3 + $0xb8] sm:$0xff]
        %v441 = vld [vmem:[#allocation3 + $0xc0] sm:$0xff]
        %v442 = vld [vmem:[#allocation3 + $0xc8] sm:$0xff]
        %v443 = vld [vmem:[#allocation3 + $0xd0] sm:$0xff]
        %v444 = vld [vmem:[#allocation3 + $0xd8] sm:$0xff]
        %v445 = vld [vmem:[#allocation3 + $0xe0] sm:$0xff]
        %v446 = vld [vmem:[#allocation3 + $0xe8] sm:$0xff]
        %v447 = vld [vmem:[#allocation3 + $0xf0] sm:$0xff]
        %v448 = vld [vmem:[#allocation3 + $0xf8] sm:$0xff]
        %vm449 = vcmask 523264
        %v451 = vsel %vm449, %v415, 0
        %v454 = vsel %vm449, %v416, 0
        %456 = vmatprep.subr.mxu0 %v418
        %457 = vmatpush1.msra.mxu0 %v417
        %458 = vmatprep.subr.mxu0 %v422
        %459 = vmatpush1.msra.mxu0 %v421
        %460 = vmatprep.subr.mxu0 %v426
        %461 = vmatpush1.msra.mxu0 %v425
        %462 = vmatprep.subr.mxu0 %v430
        %463 = vmatpush1.msra.mxu0 %v429
        %464 = vmatprep.subr.mxu0 %v434
        %465 = vmatpush1.msra.mxu0 %v433
        %466 = vmatprep.subr.mxu0 %v438
        %467 = vmatpush1.msra.mxu0 %v437
        %468 = vmatprep.subr.mxu0 %v442
        %469 = vmatpush1.msra.mxu0 %v441
        %470 = vmatprep.subr.mxu0 %v446
        %471 = vmatpush1.msra.mxu0 %v445
        %472 = vmatprep.subr.mxu0 0.0
        %473 = vmatpush1.msra.mxu0 0.0
        %474 = vmatprep.subr.mxu0 0.0
        %475 = vmatpush1.msra.mxu0 0.0
        %476 = vmatprep.subr.mxu0 0.0
        %477 = vmatpush1.msra.mxu0 0.0
        %478 = vmatprep.subr.mxu0 0.0
        %479 = vmatpush1.msra.mxu0 0.0
        %480 = vmatprep.subr.mxu0 0.0
        %481 = vmatpush1.msra.mxu0 0.0
        %482 = vmatprep.subr.mxu0 0.0
        %483 = vmatpush1.msra.mxu0 0.0
        %484 = vmatprep.subr.mxu0 0.0
        %485 = vmatpush1.msra.mxu0 0.0
        %486 = vmatprep.subr.mxu0 0.0
        %487 = vmatpush1.msra.mxu0 0.0
        %488 = vmatprep.subr.mxu0 0.0
        %489 = vmatpush1.msra.mxu0 0.0
        %490 = vmatprep.subr.mxu0 0.0
        %491 = vmatpush1.msra.mxu0 0.0
        %492 = vmatprep.subr.mxu0 0.0
        %493 = vmatpush1.msra.mxu0 0.0
        %494 = vmatprep.subr.mxu0 0.0
        %495 = vmatpush1.msra.mxu0 0.0
        %496 = vmatprep.subr.mxu0 0.0
        %497 = vmatpush1.msra.mxu0 0.0
        %498 = vmatprep.subr.mxu0 0.0
        %499 = vmatpush1.msra.mxu0 0.0
        %500 = vmatprep.subr.mxu0 0.0
        %501 = vmatpush1.msra.mxu0 0.0
        %502 = vmatprep.subr.mxu0 0.0
        %503 = vmatpush1.msra.mxu0 0.0
        %504 = vmatprep.subr.mxu0 0.0
        %505 = vmatpush1.msra.mxu0 0.0
        %506 = vmatprep.subr.mxu0 0.0
        %507 = vmatpush1.msra.mxu0 0.0
        %508 = vmatprep.subr.mxu0 0.0
        %509 = vmatpush1.msra.mxu0 0.0
        %510 = vmatprep.subr.mxu0 0.0
        %511 = vmatpush1.msra.mxu0 0.0
        %512 = vmatprep.subr.mxu0 0.0
        %513 = vmatpush1.msra.mxu0 0.0
        %514 = vmatprep.subr.mxu0 0.0
        %515 = vmatpush1.msra.mxu0 0.0
        %516 = vmatprep.subr.mxu0 0.0
        %517 = vmatpush1.msra.mxu0 0.0
        %518 = vmatprep.subr.mxu0 0.0
        %519 = vmatpush1.msra.mxu0 0.0
        %520 = vmatprep.mubr.f32.mxu0 0.0
        %521 = vmatmul.mubr.f32.gmra.mrb[0].mxu0 %v451
        %v522 = vpop.f32.mrb[0].mxu0
        %v523 = vadd.f32 0.0, %v522
        %v524 = vpop.f32.mrb[0].mxu0
        %v525 = vadd.f32 0.0, %v524
        %526 = vmatprep.mubr.f32.mxu0 0.0
        %527 = vmatmul.mubr.f32.gmra.mrb[0].mxu0 %v454
        %v528 = vpop.f32.mrb[0].mxu0
        %v529 = vadd.f32 0.0, %v528
        %v530 = vpop.f32.mrb[0].mxu0
        %v531 = vadd.f32 0.0, %v530
        %532 = vdwg.mxu0
        %533 = vmatprep.subr.mxu0 %v420
        %534 = vmatpush1.msra.mxu0 %v419
        %535 = vmatprep.subr.mxu0 %v424
        %536 = vmatpush1.msra.mxu0 %v423
        %537 = vmatprep.subr.mxu0 %v428
        %538 = vmatpush1.msra.mxu0 %v427
        %539 = vmatprep.subr.mxu0 %v432
        %540 = vmatpush1.msra.mxu0 %v431
        %541 = vmatprep.subr.mxu0 %v436
        %542 = vmatpush1.msra.mxu0 %v435
        %543 = vmatprep.subr.mxu0 %v440
        %544 = vmatpush1.msra.mxu0 %v439
        %545 = vmatprep.subr.mxu0 %v444
        %546 = vmatpush1.msra.mxu0 %v443
        %547 = vmatprep.subr.mxu0 %v448
        %548 = vmatpush1.msra.mxu0 %v447
        %549 = vmatprep.subr.mxu0 0.0
        %550 = vmatpush1.msra.mxu0 0.0
        %551 = vmatprep.subr.mxu0 0.0
        %552 = vmatpush1.msra.mxu0 0.0
        %553 = vmatprep.subr.mxu0 0.0
        %554 = vmatpush1.msra.mxu0 0.0
        %555 = vmatprep.subr.mxu0 0.0
        %556 = vmatpush1.msra.mxu0 0.0
        %557 = vmatprep.subr.mxu0 0.0
        %558 = vmatpush1.msra.mxu0 0.0
        %559 = vmatprep.subr.mxu0 0.0
        %560 = vmatpush1.msra.mxu0 0.0
        %561 = vmatprep.subr.mxu0 0.0
        %562 = vmatpush1.msra.mxu0 0.0
        %563 = vmatprep.subr.mxu0 0.0
        %564 = vmatpush1.msra.mxu0 0.0
        %565 = vmatprep.subr.mxu0 0.0
        %566 = vmatpush1.msra.mxu0 0.0
        %567 = vmatprep.subr.mxu0 0.0
        %568 = vmatpush1.msra.mxu0 0.0
        %569 = vmatprep.subr.mxu0 0.0
        %570 = vmatpush1.msra.mxu0 0.0
        %571 = vmatprep.subr.mxu0 0.0
        %572 = vmatpush1.msra.mxu0 0.0
        %573 = vmatprep.subr.mxu0 0.0
        %574 = vmatpush1.msra.mxu0 0.0
        %575 = vmatprep.subr.mxu0 0.0
        %576 = vmatpush1.msra.mxu0 0.0
        %577 = vmatprep.subr.mxu0 0.0
        %578 = vmatpush1.msra.mxu0 0.0
        %579 = vmatprep.subr.mxu0 0.0
        %580 = vmatpush1.msra.mxu0 0.0
        %581 = vmatprep.subr.mxu0 0.0
        %582 = vmatpush1.msra.mxu0 0.0
        %583 = vmatprep.subr.mxu0 0.0
        %584 = vmatpush1.msra.mxu0 0.0
        %585 = vmatprep.subr.mxu0 0.0
        %586 = vmatpush1.msra.mxu0 0.0
        %587 = vmatprep.subr.mxu0 0.0
        %588 = vmatpush1.msra.mxu0 0.0
        %589 = vmatprep.subr.mxu0 0.0
        %590 = vmatpush1.msra.mxu0 0.0
        %591 = vmatprep.subr.mxu0 0.0
        %592 = vmatpush1.msra.mxu0 0.0
        %593 = vmatprep.subr.mxu0 0.0
        %594 = vmatpush1.msra.mxu0 0.0
        %595 = vmatprep.subr.mxu0 0.0
        %596 = vmatpush1.msra.mxu0 0.0
        %597 = vmatprep.mubr.f32.mxu0 0.0
        %598 = vmatmul.mubr.f32.gmra.mrb[0].mxu0 %v451
        %v599 = vpop.f32.mrb[0].mxu0
        %v600 = vadd.f32 0.0, %v599
        %v601 = vpop.f32.mrb[0].mxu0
        %v602 = vadd.f32 0.0, %v601
        %603 = vmatprep.mubr.f32.mxu0 0.0
        %604 = vmatmul.mubr.f32.gmra.mrb[0].mxu0 %v454
        %v605 = vpop.f32.mrb[0].mxu0
        %v606 = vadd.f32 0.0, %v605
        %v607 = vpop.f32.mrb[0].mxu0
        %v608 = vadd.f32 0.0, %v607
        %609 = vdwg.mxu0
        %v610 = vld [vmem:[%s2] ss:$2 sm:$0xf]
        %v612 = vlaneseq
        %v613 = vshrl.u32 %v612, 7
        %v614 = vsub.s32 0, %v613
        %v615 = vrot.slane %v610, %v614
        %v616 = vlaneseq
        %v617 = vshrl.u32 %v616, 7
        %v618 = vsub.s32 1, %v617
        %v619 = vrot.slane %v610, %v618
        %v620 = vlaneseq
        %v621 = vshrl.u32 %v620, 7
        %v622 = vsub.s32 2, %v621
        %v623 = vrot.slane %v610, %v622
        %v624 = vlaneseq
        %v625 = vshrl.u32 %v624, 7
        %v626 = vsub.s32 3, %v625
        %v627 = vrot.slane %v610, %v626
        %v632 = vmul.f32 %v523, %v615
        %v633 = vmul.f32 %v525, %v619
        %v634 = vmul.f32 %v600, %v623
        %v635 = vmul.f32 %v602, %v627
        %v636 = vmul.f32 %v529, %v615
        %v637 = vmul.f32 %v531, %v619
        %v638 = vmul.f32 %v606, %v623
        %v639 = vmul.f32 %v608, %v627
        %s640 = scalar_lea.vmem %s2, 1
        %v641 = vld [vmem:[%s640] ss:$2 sm:$0xf]
        %v643 = vlaneseq
        %v644 = vshrl.u32 %v643, 7
        %v645 = vsub.s32 0, %v644
        %v646 = vrot.slane %v641, %v645
        %v647 = vlaneseq
        %v648 = vshrl.u32 %v647, 7
        %v649 = vsub.s32 1, %v648
        %v650 = vrot.slane %v641, %v649
        %v651 = vlaneseq
        %v652 = vshrl.u32 %v651, 7
        %v653 = vsub.s32 2, %v652
        %v654 = vrot.slane %v641, %v653
        %v655 = vlaneseq
        %v656 = vshrl.u32 %v655, 7
        %v657 = vsub.s32 3, %v656
        %v658 = vrot.slane %v641, %v657
        %v663 = vadd.f32 %v632, %v646
        %v664 = vadd.f32 %v633, %v650
        %v665 = vadd.f32 %v634, %v654
        %v666 = vadd.f32 %v635, %v658
        %v667 = vadd.f32 %v636, %v646
        %v668 = vadd.f32 %v637, %v650
        %v669 = vadd.f32 %v638, %v654
        %v670 = vadd.f32 %v639, %v658
        %v671 = vadd.f32 %v664, 3.0
        %v672 = vadd.f32 %v665, 3.0
        %v673 = vadd.f32 %v666, 3.0
        %v674 = vadd.f32 %v668, 3.0
        %v675 = vadd.f32 %v669, 3.0
        %v676 = vadd.f32 %v670, 3.0
        %v677 = vmax.f32 %v671, 0.0
        %v678 = vmax.f32 %v672, 0.0
        %v679 = vmax.f32 %v673, 0.0
        %v680 = vmax.f32 %v674, 0.0
        %v681 = vmax.f32 %v675, 0.0
        %v682 = vmax.f32 %v676, 0.0
        %v683 = vmin.f32 %v677, 6.0
        %v684 = vmin.f32 %v678, 6.0
        %v685 = vmin.f32 %v679, 6.0
        %v686 = vmin.f32 %v680, 6.0
        %v687 = vmin.f32 %v681, 6.0
        %v688 = vmin.f32 %v682, 6.0
        %v689 = vmul.f32 %v664, %v683
        %v690 = vmul.f32 %v665, %v684
        %v691 = vmul.f32 %v666, %v685
        %v692 = vmul.f32 %v668, %v686
        %v693 = vmul.f32 %v669, %v687
        %v694 = vmul.f32 %v670, %v688
        %v695 = vmul.f32 %v689, 0.16666667
        %v696 = vmul.f32 %v690, 0.16666667
        %v697 = vmul.f32 %v691, 0.16666667
        %v698 = vmul.f32 %v692, 0.16666667
        %v699 = vmul.f32 %v693, 0.16666667
        %v700 = vmul.f32 %v694, 0.16666667
        %v701 = vlaneseq
        %vm702 = vcmp.ge.s32.totalorder %v701, 0
        %vm703 = vcmp.lt.s32.totalorder %v701, 288
        %vm704 = vmand %vm702, %vm703
        %s705 = scalar_lea.vmem [#allocation2], 7
        %706 = vst.msk [vmem:[%s705] ss:$8 sm:$0x7] %vm704, 0.0
        %707 = vst.msk [vmem:[%s705] ss:$8 sm:$0x0] %vm704, 0.0
        %s708 = scalar_lea.vmem [#allocation2], 72
        %709 = vst.msk [vmem:[%s708] ss:$8 sm:$0x7] %vm704, 0.0
        %710 = vst.msk [vmem:[%s708] ss:$8 sm:$0x0] %vm704, 0.0
        %711 = vst [vmem:[#allocation2 + $0x18] sm:$0xff] %v695
        %712 = vst [vmem:[#allocation2 + $0x20] sm:$0xff] %v696
        %vm713 = vcmask 261120
        %714 = vst.msk [vmem:[#allocation2 + $0x28] sm:$0xff] %vm713, %v697
        %715 = vst [vmem:[#allocation2 + $0x30] sm:$0xff] %v698
        %716 = vst [vmem:[#allocation2 + $0x38] sm:$0xff] %v699
        %717 = vst.msk [vmem:[#allocation2 + $0x40] sm:$0xff] %vm713, %v700
        %v718 = vld [vmem:[#allocation2] sm:$0x80]
        %v719 = vld [vmem:[#allocation2 + $0x8] sm:$0x80]
        %v720 = vld [vmem:[#allocation2 + $0x18] sm:$0xff]
        %v721 = vld [vmem:[#allocation2 + $0x20] sm:$0xff]
        %v722 = vld [vmem:[#allocation2 + $0x30] sm:$0x7f]
        %v723 = vld [vmem:[#allocation2 + $0x38] sm:$0x7f]
        %v724 = vld [vmem:[%s3] ss:$8 sm:$0x3]
        %v726 = vlaneseq
        %v727 = vshrl.u32 %v726, 7
        %v728 = vsub.s32 0, %v727
        %v729 = vrot.slane %v724, %v728
        %v730 = vlaneseq
        %v731 = vshrl.u32 %v730, 7
        %v732 = vsub.s32 1, %v731
        %v733 = vrot.slane %v724, %v732
        %v736 = vmul.f32 %v718, %v729
        %v737 = vmul.f32 %v719, %v733
        %v738 = vmul.f32 %v720, %v729
        %v739 = vmul.f32 %v721, %v733
        %v740 = vmul.f32 %v722, %v729
        %v741 = vmul.f32 %v723, %v733
        %v742 = vadd.f32 %v736, 0.0
        %v743 = vadd.f32 %v737, 0.0
        %v744 = vadd.f32 %v738, 0.0
        %v745 = vadd.f32 %v739, 0.0
        %v746 = vadd.f32 %v740, 0.0
        %v747 = vadd.f32 %v741, 0.0
        %v748 = vld [vmem:[#allocation2 + $0x10] sm:$0x80]
        %v749 = vld [vmem:[#allocation2 + $0x28] sm:$0xff]
        %v750 = vld [vmem:[#allocation2 + $0x40] sm:$0x7f]
        %s751 = scalar_lea.vmem %s3, 1
        %v752 = vld [vmem:[%s751] ss:$8 sm:$0x3]
        %v754 = vlaneseq
        %v755 = vshrl.u32 %v754, 7
        %v756 = vsub.s32 0, %v755
        %v757 = vrot.slane %v752, %v756
        %v758 = vlaneseq
        %v759 = vshrl.u32 %v758, 7
        %v760 = vsub.s32 1, %v759
        %v761 = vrot.slane %v752, %v760
        %762 = vrot.lane.b32.xlu0 %v757, 16
        %v763 = vpop.permute.xlu0 %762
        %764 = vrot.lane.b32.xlu0 %v761, 16
        %v765 = vpop.permute.xlu0 %764
        %vm766 = vcmask 130048
        %v767 = vsel %vm766, %v763, %v765
        %v771 = vmul.f32 %v718, %v763
        %v772 = vmul.f32 %v719, %v767
        %v773 = vmul.f32 %v748, %v765
        %v774 = vmul.f32 %v720, %v763
        %v775 = vmul.f32 %v721, %v767
        %v776 = vmul.f32 %v749, %v765
        %v777 = vmul.f32 %v722, %v763
        %v778 = vmul.f32 %v723, %v767
        %v779 = vmul.f32 %v750, %v765
        %789 = vrot.lane.b32.xlu0 %v771, 112
        %v790 = vpop.permute.xlu0 %789
        %791 = vrot.lane.b32.xlu0 %v772, 112
        %v792 = vpop.permute.xlu0 %791
        %793 = vrot.lane.b32.xlu0 %v773, 112
        %v794 = vpop.permute.xlu0 %793
        %795 = vrot.lane.b32.xlu0 %v774, 112
        %v796 = vpop.permute.xlu0 %795
        %797 = vrot.lane.b32.xlu0 %v775, 112
        %v798 = vpop.permute.xlu0 %797
        %799 = vrot.lane.b32.xlu0 %v776, 112
        %v800 = vpop.permute.xlu0 %799
        %801 = vrot.lane.b32.xlu0 %v777, 112
        %v802 = vpop.permute.xlu0 %801
        %803 = vrot.lane.b32.xlu0 %v778, 112
        %v804 = vpop.permute.xlu0 %803
        %805 = vrot.lane.b32.xlu0 %v779, 112
        %v806 = vpop.permute.xlu0 %805
        %vm807 = vcmask 916480
        %v808 = vsel %vm807, %v790, %v792
        %v809 = vsel %vm807, %v792, %v794
        %v810 = vsel %vm807, %v796, %v798
        %v811 = vsel %vm807, %v798, %v800
        %v812 = vsel %vm807, %v802, %v804
        %v813 = vsel %vm807, %v804, %v806
        %v820 = vadd.f32 %v742, %v808
        %v821 = vadd.f32 %v743, %v809
        %v822 = vadd.f32 %v744, %v810
        %v823 = vadd.f32 %v745, %v811
        %v824 = vadd.f32 %v746, %v812
        %v825 = vadd.f32 %v747, %v813
        %s826 = scalar_lea.vmem %s3, 2
        %v827 = vld [vmem:[%s826] ss:$8 sm:$0x3]
        %v829 = vlaneseq
        %v830 = vshrl.u32 %v829, 7
        %v831 = vsub.s32 0, %v830
        %v832 = vrot.slane %v827, %v831
        %v833 = vlaneseq
        %v834 = vshrl.u32 %v833, 7
        %v835 = vsub.s32 1, %v834
        %v836 = vrot.slane %v827, %v835
        %837 = vrot.lane.b32.xlu0 %v832, 32
        %v838 = vpop.permute.xlu0 %837
        %839 = vrot.lane.b32.xlu0 %v836, 32
        %v840 = vpop.permute.xlu0 %839
        %v841 = vsel %vm713, %v838, %v840
        %v845 = vmul.f32 %v718, %v838
        %v846 = vmul.f32 %v719, %v841
        %v847 = vmul.f32 %v748, %v840
        %v848 = vmul.f32 %v720, %v838
        %v849 = vmul.f32 %v721, %v841
        %v850 = vmul.f32 %v749, %v840
        %v851 = vmul.f32 %v722, %v838
        %v852 = vmul.f32 %v723, %v841
        %v853 = vmul.f32 %v750, %v840
        %863 = vrot.lane.b32.xlu0 %v845, 96
        %v864 = vpop.permute.xlu0 %863
        %865 = vrot.lane.b32.xlu0 %v846, 96
        %v866 = vpop.permute.xlu0 %865
        %867 = vrot.lane.b32.xlu0 %v847, 96
        %v868 = vpop.permute.xlu0 %867
        %869 = vrot.lane.b32.xlu0 %v848, 96
        %v870 = vpop.permute.xlu0 %869
        %871 = vrot.lane.b32.xlu0 %v849, 96
        %v872 = vpop.permute.xlu0 %871
        %873 = vrot.lane.b32.xlu0 %v850, 96
        %v874 = vpop.permute.xlu0 %873
        %875 = vrot.lane.b32.xlu0 %v851, 96
        %v876 = vpop.permute.xlu0 %875
        %877 = vrot.lane.b32.xlu0 %v852, 96
        %v878 = vpop.permute.xlu0 %877
        %879 = vrot.lane.b32.xlu0 %v853, 96
        %v880 = vpop.permute.xlu0 %879
        %vm881 = vcmask 785408
        %v882 = vsel %vm881, %v864, %v866
        %v883 = vsel %vm881, %v866, %v868
        %v884 = vsel %vm881, %v870, %v872
        %v885 = vsel %vm881, %v872, %v874
        %v886 = vsel %vm881, %v876, %v878
        %v887 = vsel %vm881, %v878, %v880
        %v894 = vadd.f32 %v820, %v882
        %v895 = vadd.f32 %v821, %v883
        %v896 = vadd.f32 %v822, %v884
        %v897 = vadd.f32 %v823, %v885
        %v898 = vadd.f32 %v824, %v886
        %v899 = vadd.f32 %v825, %v887
        %v900 = vld [vmem:[#allocation2 + $0x30] sm:$0xff]
        %v901 = vld [vmem:[#allocation2 + $0x38] sm:$0xff]
        %s902 = scalar_lea.vmem %s3, 3
        %v903 = vld [vmem:[%s902] ss:$8 sm:$0x3]
        %v905 = vlaneseq
        %v906 = vshrl.u32 %v905, 7
        %v907 = vsub.s32 0, %v906
        %v908 = vrot.slane %v903, %v907
        %v909 = vlaneseq
        %v910 = vshrl.u32 %v909, 7
        %v911 = vsub.s32 1, %v910
        %v912 = vrot.slane %v903, %v911
        %v915 = vmul.f32 %v720, %v908
        %v916 = vmul.f32 %v721, %v912
        %v917 = vmul.f32 %v900, %v908
        %v918 = vmul.f32 %v901, %v912
        %vm923 = vcmask 1046528
        %v924 = vrot.slane %v915, 1
        %v925 = vrot.slane %v916, 1
        %v926 = vrot.slane %v917, 1
        %v927 = vsel %vm923, %v924, %v926
        %v928 = vrot.slane %v918, 1
        %v929 = vsel %vm923, %v925, %v928
        %v936 = vadd.f32 %v894, %v924
        %v937 = vadd.f32 %v895, %v925
        %v938 = vadd.f32 %v896, %v927
        %v939 = vadd.f32 %v897, %v929
        %v940 = vadd.f32 %v898, %v926
        %v941 = vadd.f32 %v899, %v928
        %v942 = vld [vmem:[#allocation2 + $0x40] sm:$0xff]
        %s943 = scalar_lea.vmem %s3, 4
        %v944 = vld [vmem:[%s943] ss:$8 sm:$0x3]
        %v946 = vlaneseq
        %v947 = vshrl.u32 %v946, 7
        %v948 = vsub.s32 0, %v947
        %v949 = vrot.slane %v944, %v948
        %v950 = vlaneseq
        %v951 = vshrl.u32 %v950, 7
        %v952 = vsub.s32 1, %v951
        %v953 = vrot.slane %v944, %v952
        %954 = vrot.lane.b32.xlu0 %v949, 16
        %v955 = vpop.permute.xlu0 %954
        %956 = vrot.lane.b32.xlu0 %v953, 16
        %v957 = vpop.permute.xlu0 %956
        %v958 = vsel %vm766, %v955, %v957
        %v962 = vmul.f32 %v720, %v955
        %v963 = vmul.f32 %v721, %v958
        %v964 = vmul.f32 %v749, %v957
        %v965 = vmul.f32 %v900, %v955
        %v966 = vmul.f32 %v901, %v958
        %v967 = vmul.f32 %v942, %v957
        %v974 = vrot.slane %v962, 1
        %v975 = vrot.slane %v963, 1
        %v976 = vrot.slane %v964, 1
        %v977 = vrot.slane %v965, 1
        %v978 = vsel %vm923, %v974, %v977
        %v979 = vrot.slane %v966, 1
        %v980 = vsel %vm923, %v975, %v979
        %v981 = vrot.slane %v967, 1
        %v982 = vsel %vm923, %v976, %v981
        %983 = vrot.lane.b32.xlu0 %v974, 112
        %v984 = vpop.permute.xlu0 %983
        %985 = vrot.lane.b32.xlu0 %v975, 112
        %v986 = vpop.permute.xlu0 %985
        %987 = vrot.lane.b32.xlu0 %v976, 112
        %v988 = vpop.permute.xlu0 %987
        %989 = vrot.lane.b32.xlu0 %v978, 112
        %v990 = vpop.permute.xlu0 %989
        %991 = vrot.lane.b32.xlu0 %v980, 112
        %v992 = vpop.permute.xlu0 %991
        %993 = vrot.lane.b32.xlu0 %v982, 112
        %v994 = vpop.permute.xlu0 %993
        %995 = vrot.lane.b32.xlu0 %v977, 112
        %v996 = vpop.permute.xlu0 %995
        %997 = vrot.lane.b32.xlu0 %v979, 112
        %v998 = vpop.permute.xlu0 %997
        %999 = vrot.lane.b32.xlu0 %v981, 112
        %v1000 = vpop.permute.xlu0 %999
        %v1001 = vsel %vm807, %v984, %v986
        %v1002 = vsel %vm807, %v986, %v988
        %v1003 = vsel %vm807, %v990, %v992
        %v1004 = vsel %vm807, %v992, %v994
        %v1005 = vsel %vm807, %v996, %v998
        %v1006 = vsel %vm807, %v998, %v1000
        %v1013 = vadd.f32 %v936, %v1001
        %v1014 = vadd.f32 %v937, %v1002
        %v1015 = vadd.f32 %v938, %v1003
        %v1016 = vadd.f32 %v939, %v1004
        %v1017 = vadd.f32 %v940, %v1005
        %v1018 = vadd.f32 %v941, %v1006
        %s1019 = scalar_lea.vmem %s3, 5
        %v1020 = vld [vmem:[%s1019] ss:$8 sm:$0x3]
        %v1022 = vlaneseq
        %v1023 = vshrl.u32 %v1022, 7
        %v1024 = vsub.s32 0, %v1023
        %v1025 = vrot.slane %v1020, %v1024
        %v1026 = vlaneseq
        %v1027 = vshrl.u32 %v1026, 7
        %v1028 = vsub.s32 1, %v1027
        %v1029 = vrot.slane %v1020, %v1028
        %1030 = vrot.lane.b32.xlu0 %v1025, 32
        %v1031 = vpop.permute.xlu0 %1030
        %1032 = vrot.lane.b32.xlu0 %v1029, 32
        %v1033 = vpop.permute.xlu0 %1032
        %v1034 = vsel %vm713, %v1031, %v1033
        %v1038 = vmul.f32 %v720, %v1031
        %v1039 = vmul.f32 %v721, %v1034
        %v1040 = vmul.f32 %v749, %v1033
        %v1041 = vmul.f32 %v900, %v1031
        %v1042 = vmul.f32 %v901, %v1034
        %v1043 = vmul.f32 %v942, %v1033
        %v1050 = vrot.slane %v1038, 1
        %v1051 = vrot.slane %v1039, 1
        %v1052 = vrot.slane %v1040, 1
        %v1053 = vrot.slane %v1041, 1
        %v1054 = vsel %vm923, %v1050, %v1053
        %v1055 = vrot.slane %v1042, 1
        %v1056 = vsel %vm923, %v1051, %v1055
        %v1057 = vrot.slane %v1043, 1
        %v1058 = vsel %vm923, %v1052, %v1057
        %1059 = vrot.lane.b32.xlu0 %v1050, 96
        %v1060 = vpop.permute.xlu0 %1059
        %1061 = vrot.lane.b32.xlu0 %v1051, 96
        %v1062 = vpop.permute.xlu0 %1061
        %1063 = vrot.lane.b32.xlu0 %v1052, 96
        %v1064 = vpop.permute.xlu0 %1063
        %1065 = vrot.lane.b32.xlu0 %v1054, 96
        %v1066 = vpop.permute.xlu0 %1065
        %1067 = vrot.lane.b32.xlu0 %v1056, 96
        %v1068 = vpop.permute.xlu0 %1067
        %1069 = vrot.lane.b32.xlu0 %v1058, 96
        %v1070 = vpop.permute.xlu0 %1069
        %1071 = vrot.lane.b32.xlu0 %v1053, 96
        %v1072 = vpop.permute.xlu0 %1071
        %1073 = vrot.lane.b32.xlu0 %v1055, 96
        %v1074 = vpop.permute.xlu0 %1073
        %1075 = vrot.lane.b32.xlu0 %v1057, 96
        %v1076 = vpop.permute.xlu0 %1075
        %v1077 = vsel %vm881, %v1060, %v1062
        %v1078 = vsel %vm881, %v1062, %v1064
        %v1079 = vsel %vm881, %v1066, %v1068
        %v1080 = vsel %vm881, %v1068, %v1070
        %v1081 = vsel %vm881, %v1072, %v1074
        %v1082 = vsel %vm881, %v1074, %v1076
        %v1089 = vadd.f32 %v1013, %v1077
        %v1090 = vadd.f32 %v1014, %v1078
        %v1091 = vadd.f32 %v1015, %v1079
        %v1092 = vadd.f32 %v1016, %v1080
        %v1093 = vadd.f32 %v1017, %v1081
        %v1094 = vadd.f32 %v1018, %v1082
        %v1095 = vld [vmem:[#allocation2 + $0x18] sm:$0xfe]
        %v1096 = vld [vmem:[#allocation2 + $0x20] sm:$0xfe]
        %v1097 = vld [vmem:[#allocation2 + $0x48] sm:$0x1]
        %v1098 = vld [vmem:[#allocation2 + $0x50] sm:$0x1]
        %s1099 = scalar_lea.vmem %s3, 6
        %v1100 = vld [vmem:[%s1099] ss:$8 sm:$0x3]
        %v1102 = vlaneseq
        %v1103 = vshrl.u32 %v1102, 7
        %v1104 = vsub.s32 0, %v1103
        %v1105 = vrot.slane %v1100, %v1104
        %v1106 = vlaneseq
        %v1107 = vshrl.u32 %v1106, 7
        %v1108 = vsub.s32 1, %v1107
        %v1109 = vrot.slane %v1100, %v1108
        %v1112 = vmul.f32 %v1095, %v1105
        %v1113 = vmul.f32 %v1096, %v1109
        %v1114 = vmul.f32 %v900, %v1105
        %v1115 = vmul.f32 %v901, %v1109
        %v1116 = vmul.f32 %v1097, %v1105
        %v1117 = vmul.f32 %v1098, %v1109
        %vm1124 = vcmask 1045504
        %v1125 = vrot.slane %v1112, 2
        %v1126 = vrot.slane %v1113, 2
        %v1127 = vrot.slane %v1114, 2
        %v1128 = vsel %vm1124, %v1125, %v1127
        %v1129 = vrot.slane %v1115, 2
        %v1130 = vsel %vm1124, %v1126, %v1129
        %v1131 = vrot.slane %v1116, 2
        %v1132 = vsel %vm1124, %v1127, %v1131
        %v1133 = vrot.slane %v1117, 2
        %v1134 = vsel %vm1124, %v1129, %v1133
        %v1141 = vadd.f32 %v1089, %v1125
        %v1142 = vadd.f32 %v1090, %v1126
        %v1143 = vadd.f32 %v1091, %v1128
        %v1144 = vadd.f32 %v1092, %v1130
        %v1145 = vadd.f32 %v1093, %v1132
        %v1146 = vadd.f32 %v1094, %v1134
        %v1147 = vld [vmem:[#allocation2 + $0x28] sm:$0xfe]
        %v1148 = vld [vmem:[#allocation2 + $0x58] sm:$0x1]
        %s1149 = scalar_lea.vmem %s3, 7
        %v1150 = vld [vmem:[%s1149] ss:$8 sm:$0x3]
        %v1152 = vlaneseq
        %v1153 = vshrl.u32 %v1152, 7
        %v1154 = vsub.s32 0, %v1153
        %v1155 = vrot.slane %v1150, %v1154
        %v1156 = vlaneseq
        %v1157 = vshrl.u32 %v1156, 7
        %v1158 = vsub.s32 1, %v1157
        %v1159 = vrot.slane %v1150, %v1158
        %1160 = vrot.lane.b32.xlu0 %v1155, 16
        %v1161 = vpop.permute.xlu0 %1160
        %1162 = vrot.lane.b32.xlu0 %v1159, 16
        %v1163 = vpop.permute.xlu0 %1162
        %v1164 = vsel %vm766, %v1161, %v1163
        %v1168 = vmul.f32 %v1095, %v1161
        %v1169 = vmul.f32 %v1096, %v1164
        %v1170 = vmul.f32 %v1147, %v1163
        %v1171 = vmul.f32 %v900, %v1161
        %v1172 = vmul.f32 %v901, %v1164
        %v1173 = vmul.f32 %v942, %v1163
        %v1174 = vmul.f32 %v1097, %v1161
        %v1175 = vmul.f32 %v1098, %v1164
        %v1176 = vmul.f32 %v1148, %v1163
        %v1186 = vrot.slane %v1168, 2
        %v1187 = vrot.slane %v1169, 2
        %v1188 = vrot.slane %v1170, 2
        %v1189 = vrot.slane %v1171, 2
        %v1190 = vsel %vm1124, %v1186, %v1189
        %v1191 = vrot.slane %v1172, 2
        %v1192 = vsel %vm1124, %v1187, %v1191
        %v1193 = vrot.slane %v1173, 2
        %v1194 = vsel %vm1124, %v1188, %v1193
        %v1195 = vrot.slane %v1174, 2
        %v1196 = vsel %vm1124, %v1189, %v1195
        %v1197 = vrot.slane %v1175, 2
        %v1198 = vsel %vm1124, %v1191, %v1197
        %v1199 = vrot.slane %v1176, 2
        %v1200 = vsel %vm1124, %v1193, %v1199
        %1201 = vrot.lane.b32.xlu0 %v1186, 112
        %v1202 = vpop.permute.xlu0 %1201
        %1203 = vrot.lane.b32.xlu0 %v1187, 112
        %v1204 = vpop.permute.xlu0 %1203
        %1205 = vrot.lane.b32.xlu0 %v1188, 112
        %v1206 = vpop.permute.xlu0 %1205
        %1207 = vrot.lane.b32.xlu0 %v1190, 112
        %v1208 = vpop.permute.xlu0 %1207
        %1209 = vrot.lane.b32.xlu0 %v1192, 112
        %v1210 = vpop.permute.xlu0 %1209
        %1211 = vrot.lane.b32.xlu0 %v1194, 112
        %v1212 = vpop.permute.xlu0 %1211
        %1213 = vrot.lane.b32.xlu0 %v1196, 112
        %v1214 = vpop.permute.xlu0 %1213
        %1215 = vrot.lane.b32.xlu0 %v1198, 112
        %v1216 = vpop.permute.xlu0 %1215
        %1217 = vrot.lane.b32.xlu0 %v1200, 112
        %v1218 = vpop.permute.xlu0 %1217
        %v1219 = vsel %vm807, %v1202, %v1204
        %v1220 = vsel %vm807, %v1204, %v1206
        %v1221 = vsel %vm807, %v1208, %v1210
        %v1222 = vsel %vm807, %v1210, %v1212
        %v1223 = vsel %vm807, %v1214, %v1216
        %v1224 = vsel %vm807, %v1216, %v1218
        %v1231 = vadd.f32 %v1141, %v1219
        %v1232 = vadd.f32 %v1142, %v1220
        %v1233 = vadd.f32 %v1143, %v1221
        %v1234 = vadd.f32 %v1144, %v1222
        %v1235 = vadd.f32 %v1145, %v1223
        %v1236 = vadd.f32 %v1146, %v1224
        %s1237 = scalar_lea.vmem %s3, 16
        %v1238 = vld [vmem:[%s1237] ss:$8 sm:$0x3]
        %v1240 = vlaneseq
        %v1241 = vshrl.u32 %v1240, 7
        %v1242 = vsub.s32 0, %v1241
        %v1243 = vrot.slane %v1238, %v1242
        %v1244 = vlaneseq
        %v1245 = vshrl.u32 %v1244, 7
        %v1246 = vsub.s32 1, %v1245
        %v1247 = vrot.slane %v1238, %v1246
        %1248 = vrot.lane.b32.xlu0 %v1243, 32
        %v1249 = vpop.permute.xlu0 %1248
        %1250 = vrot.lane.b32.xlu0 %v1247, 32
        %v1251 = vpop.permute.xlu0 %1250
        %v1252 = vsel %vm713, %v1249, %v1251
        %v1256 = vmul.f32 %v1095, %v1249
        %v1257 = vmul.f32 %v1096, %v1252
        %v1258 = vmul.f32 %v1147, %v1251
        %v1259 = vmul.f32 %v900, %v1249
        %v1260 = vmul.f32 %v901, %v1252
        %v1261 = vmul.f32 %v942, %v1251
        %v1262 = vmul.f32 %v1097, %v1249
        %v1263 = vmul.f32 %v1098, %v1252
        %v1264 = vmul.f32 %v1148, %v1251
        %v1274 = vrot.slane %v1256, 2
        %v1275 = vrot.slane %v1257, 2
        %v1276 = vrot.slane %v1258, 2
        %v1277 = vrot.slane %v1259, 2
        %v1278 = vsel %vm1124, %v1274, %v1277
        %v1279 = vrot.slane %v1260, 2
        %v1280 = vsel %vm1124, %v1275, %v1279
        %v1281 = vrot.slane %v1261, 2
        %v1282 = vsel %vm1124, %v1276, %v1281
        %v1283 = vrot.slane %v1262, 2
        %v1284 = vsel %vm1124, %v1277, %v1283
        %v1285 = vrot.slane %v1263, 2
        %v1286 = vsel %vm1124, %v1279, %v1285
        %v1287 = vrot.slane %v1264, 2
        %v1288 = vsel %vm1124, %v1281, %v1287
        %1289 = vrot.lane.b32.xlu0 %v1274, 96
        %v1290 = vpop.permute.xlu0 %1289
        %1291 = vrot.lane.b32.xlu0 %v1275, 96
        %v1292 = vpop.permute.xlu0 %1291
        %1293 = vrot.lane.b32.xlu0 %v1276, 96
        %v1294 = vpop.permute.xlu0 %1293
        %1295 = vrot.lane.b32.xlu0 %v1278, 96
        %v1296 = vpop.permute.xlu0 %1295
        %1297 = vrot.lane.b32.xlu0 %v1280, 96
        %v1298 = vpop.permute.xlu0 %1297
        %1299 = vrot.lane.b32.xlu0 %v1282, 96
        %v1300 = vpop.permute.xlu0 %1299
        %1301 = vrot.lane.b32.xlu0 %v1284, 96
        %v1302 = vpop.permute.xlu0 %1301
        %1303 = vrot.lane.b32.xlu0 %v1286, 96
        %v1304 = vpop.permute.xlu0 %1303
        %1305 = vrot.lane.b32.xlu0 %v1288, 96
        %v1306 = vpop.permute.xlu0 %1305
        %v1307 = vsel %vm881, %v1290, %v1292
        %v1308 = vsel %vm881, %v1292, %v1294
        %v1309 = vsel %vm881, %v1296, %v1298
        %v1310 = vsel %vm881, %v1298, %v1300
        %v1311 = vsel %vm881, %v1302, %v1304
        %v1312 = vsel %vm881, %v1304, %v1306
        %v1319 = vadd.f32 %v1231, %v1307
        %v1320 = vadd.f32 %v1232, %v1308
        %v1321 = vadd.f32 %v1233, %v1309
        %v1322 = vadd.f32 %v1234, %v1310
        %v1323 = vadd.f32 %v1235, %v1311
        %v1324 = vadd.f32 %v1236, %v1312
        %v1325 = vld [vmem:[%s4] ss:$2 sm:$0x3]
        %v1327 = vlaneseq
        %v1328 = vshrl.u32 %v1327, 7
        %v1329 = vsub.s32 0, %v1328
        %v1330 = vrot.slane %v1325, %v1329
        %v1331 = vlaneseq
        %v1332 = vshrl.u32 %v1331, 7
        %v1333 = vsub.s32 1, %v1332
        %v1334 = vrot.slane %v1325, %v1333
        %v1337 = vmul.f32 %v1319, %v1330
        %v1338 = vmul.f32 %v1320, %v1334
        %v1339 = vmul.f32 %v1321, %v1330
        %v1340 = vmul.f32 %v1322, %v1334
        %v1341 = vmul.f32 %v1323, %v1330
        %v1342 = vmul.f32 %v1324, %v1334
        %s1343 = scalar_lea.vmem %s4, 1
        %v1344 = vld [vmem:[%s1343] ss:$2 sm:$0x3]
        %v1346 = vlaneseq
        %v1347 = vshrl.u32 %v1346, 7
        %v1348 = vsub.s32 0, %v1347
        %v1349 = vrot.slane %v1344, %v1348
        %v1350 = vlaneseq
        %v1351 = vshrl.u32 %v1350, 7
        %v1352 = vsub.s32 1, %v1351
        %v1353 = vrot.slane %v1344, %v1352
        %v1356 = vadd.f32 %v1337, %v1349
        %v1357 = vadd.f32 %v1338, %v1353
        %v1358 = vadd.f32 %v1339, %v1349
        %v1359 = vadd.f32 %v1340, %v1353
        %v1360 = vadd.f32 %v1341, %v1349
        %v1361 = vadd.f32 %v1342, %v1353
        %v1362 = vadd.f32 %v1356, 3.0
        %v1363 = vadd.f32 %v1357, 3.0
        %v1364 = vadd.f32 %v1358, 3.0
        %v1365 = vadd.f32 %v1359, 3.0
        %v1366 = vadd.f32 %v1360, 3.0
        %v1367 = vadd.f32 %v1361, 3.0
        %v1368 = vmax.f32 %v1362, 0.0
        %v1369 = vmax.f32 %v1363, 0.0
        %v1370 = vmax.f32 %v1364, 0.0
        %v1371 = vmax.f32 %v1365, 0.0
        %v1372 = vmax.f32 %v1366, 0.0
        %v1373 = vmax.f32 %v1367, 0.0
        %v1374 = vmin.f32 %v1368, 6.0
        %v1375 = vmin.f32 %v1369, 6.0
        %v1376 = vmin.f32 %v1370, 6.0
        %v1377 = vmin.f32 %v1371, 6.0
        %v1378 = vmin.f32 %v1372, 6.0
        %v1379 = vmin.f32 %v1373, 6.0
        %v1380 = vmul.f32 %v1356, %v1374
        %v1381 = vmul.f32 %v1357, %v1375
        %v1382 = vmul.f32 %v1358, %v1376
        %v1383 = vmul.f32 %v1359, %v1377
        %v1384 = vmul.f32 %v1360, %v1378
        %v1385 = vmul.f32 %v1361, %v1379
        %v1386 = vmul.f32 %v1380, 0.16666667
        %v1387 = vmul.f32 %v1381, 0.16666667
        %v1388 = vmul.f32 %v1382, 0.16666667
        %v1389 = vmul.f32 %v1383, 0.16666667
        %v1390 = vmul.f32 %v1384, 0.16666667
        %v1391 = vmul.f32 %v1385, 0.16666667
        %v1392 = vld [vmem:[#allocation6] sm:$0xff]
        %v1393 = vld [vmem:[#allocation6 + $0x8] sm:$0xff]
        %v1394 = vld [vmem:[#allocation6 + $0x10] sm:$0xff]
        %v1395 = vld [vmem:[#allocation6 + $0x18] sm:$0xff]
        %v1396 = vld [vmem:[#allocation6 + $0x20] sm:$0xff]
        %v1397 = vld [vmem:[#allocation6 + $0x28] sm:$0xff]
        %v1398 = vld [vmem:[#allocation6 + $0x30] sm:$0xff]
        %v1399 = vld [vmem:[#allocation6 + $0x38] sm:$0xff]
        %v1400 = vld [vmem:[#allocation6 + $0x40] sm:$0xff]
        %v1401 = vld [vmem:[#allocation6 + $0x48] sm:$0xff]
        %v1402 = vld [vmem:[#allocation6 + $0x50] sm:$0xff]
        %v1403 = vld [vmem:[#allocation6 + $0x58] sm:$0xff]
        %v1404 = vld [vmem:[#allocation6 + $0x60] sm:$0xff]
        %v1405 = vld [vmem:[#allocation6 + $0x68] sm:$0xff]
        %v1406 = vld [vmem:[#allocation6 + $0x70] sm:$0xff]
        %v1407 = vld [vmem:[#allocation6 + $0x78] sm:$0xff]
        %v1408 = vld [vmem:[#allocation6 + $0x80] sm:$0xff]
        %v1409 = vld [vmem:[#allocation6 + $0x88] sm:$0xff]
        %v1410 = vld [vmem:[#allocation6 + $0x90] sm:$0xff]
        %v1411 = vld [vmem:[#allocation6 + $0x98] sm:$0xff]
        %v1412 = vld [vmem:[#allocation6 + $0xa0] sm:$0xff]
        %v1413 = vld [vmem:[#allocation6 + $0xa8] sm:$0xff]
        %v1414 = vld [vmem:[#allocation6 + $0xb0] sm:$0xff]
        %v1415 = vld [vmem:[#allocation6 + $0xb8] sm:$0xff]
        %v1416 = vld [vmem:[#allocation6 + $0xc0] sm:$0xff]
        %v1417 = vld [vmem:[#allocation6 + $0xc8] sm:$0xff]
        %v1418 = vld [vmem:[#allocation6 + $0xd0] sm:$0xff]
        %v1419 = vld [vmem:[#allocation6 + $0xd8] sm:$0xff]
        %v1420 = vld [vmem:[#allocation6 + $0xe0] sm:$0xff]
        %v1421 = vld [vmem:[#allocation6 + $0xe8] sm:$0xff]
        %v1422 = vld [vmem:[#allocation6 + $0xf0] sm:$0xff]
        %v1423 = vld [vmem:[#allocation6 + $0xf8] sm:$0xff]
        %vm1430 = vcmask 1040384
        %v1431 = vrot.slane %v1386, 7
        %v1432 = vrot.slane %v1388, 7
        %v1433 = vsel %vm1430, %v1431, %v1432
        %v1434 = vrot.slane %v1387, 7
        %v1435 = vrot.slane %v1389, 7
        %v1436 = vsel %vm1430, %v1434, %v1435
        %v1437 = vrot.slane %v1390, 7
        %v1438 = vsel %vm1430, %v1432, %v1437
        %v1439 = vrot.slane %v1391, 7
        %v1440 = vsel %vm1430, %v1435, %v1439
        %1445 = vmatprep.subr.mxu0 0.0
        %1446 = vmatpush1.msra.mxu0 %v1392
        %1447 = vmatprep.subr.mxu0 0.0
        %1448 = vmatpush1.msra.mxu0 %v1393
        %1449 = vmatprep.subr.mxu0 0.0
        %1450 = vmatpush1.msra.mxu0 %v1394
        %1451 = vmatprep.subr.mxu0 0.0
        %1452 = vmatpush1.msra.mxu0 %v1395
        %1453 = vmatprep.subr.mxu0 0.0
        %1454 = vmatpush1.msra.mxu0 %v1396
        %1455 = vmatprep.subr.mxu0 0.0
        %1456 = vmatpush1.msra.mxu0 %v1397
        %1457 = vmatprep.subr.mxu0 0.0
        %1458 = vmatpush1.msra.mxu0 %v1398
        %1459 = vmatprep.subr.mxu0 0.0
        %1460 = vmatpush1.msra.mxu0 %v1399
        %1461 = vmatprep.subr.mxu0 0.0
        %1462 = vmatpush1.msra.mxu0 %v1400
        %1463 = vmatprep.subr.mxu0 0.0
        %1464 = vmatpush1.msra.mxu0 %v1401
        %1465 = vmatprep.subr.mxu0 0.0
        %1466 = vmatpush1.msra.mxu0 %v1402
        %1467 = vmatprep.subr.mxu0 0.0
        %1468 = vmatpush1.msra.mxu0 %v1403
        %1469 = vmatprep.subr.mxu0 0.0
        %1470 = vmatpush1.msra.mxu0 %v1404
        %1471 = vmatprep.subr.mxu0 0.0
        %1472 = vmatpush1.msra.mxu0 %v1405
        %1473 = vmatprep.subr.mxu0 0.0
        %1474 = vmatpush1.msra.mxu0 %v1406
        %1475 = vmatprep.subr.mxu0 0.0
        %1476 = vmatpush1.msra.mxu0 %v1407
        %1477 = vmatprep.subr.mxu0 0.0
        %1478 = vmatpush1.msra.mxu0 %v1408
        %1479 = vmatprep.subr.mxu0 0.0
        %1480 = vmatpush1.msra.mxu0 %v1409
        %1481 = vmatprep.subr.mxu0 0.0
        %1482 = vmatpush1.msra.mxu0 %v1410
        %1483 = vmatprep.subr.mxu0 0.0
        %1484 = vmatpush1.msra.mxu0 %v1411
        %1485 = vmatprep.subr.mxu0 0.0
        %1486 = vmatpush1.msra.mxu0 %v1412
        %1487 = vmatprep.subr.mxu0 0.0
        %1488 = vmatpush1.msra.mxu0 %v1413
        %1489 = vmatprep.subr.mxu0 0.0
        %1490 = vmatpush1.msra.mxu0 %v1414
        %1491 = vmatprep.subr.mxu0 0.0
        %1492 = vmatpush1.msra.mxu0 %v1415
        %1493 = vmatprep.subr.mxu0 0.0
        %1494 = vmatpush1.msra.mxu0 %v1416
        %1495 = vmatprep.subr.mxu0 0.0
        %1496 = vmatpush1.msra.mxu0 %v1417
        %1497 = vmatprep.subr.mxu0 0.0
        %1498 = vmatpush1.msra.mxu0 %v1418
        %1499 = vmatprep.subr.mxu0 0.0
        %1500 = vmatpush1.msra.mxu0 %v1419
        %1501 = vmatprep.subr.mxu0 0.0
        %1502 = vmatpush1.msra.mxu0 %v1420
        %1503 = vmatprep.subr.mxu0 0.0
        %1504 = vmatpush1.msra.mxu0 %v1421
        %1505 = vmatprep.subr.mxu0 0.0
        %1506 = vmatpush1.msra.mxu0 %v1422
        %1507 = vmatprep.subr.mxu0 0.0
        %1508 = vmatpush1.msra.mxu0 %v1423
        %1509 = vmatprep.mubr.f32.mxu0 %v1436
        %1510 = vmatmul.mubr.f32.gmra.mrb[0].mxu0 %v1433
        %v1511 = vpop.f32.mrb[0].mxu0
        %v1512 = vadd.f32 0.0, %v1511
        %v1513 = vpop.f32.mrb[0].mxu0
        %1514 = vmatprep.mubr.f32.mxu0 %v1440
        %1515 = vmatmul.mubr.f32.gmra.mrb[0].mxu0 %v1438
        %v1516 = vpop.f32.mrb[0].mxu0
        %v1517 = vadd.f32 0.0, %v1516
        %v1518 = vpop.f32.mrb[0].mxu0
        %1519 = vdwg.mxu0
        %v1520 = vld [vmem:[%s6] sm:$0x1]
        %v1521 = vlaneseq
        %v1522 = vshrl.u32 %v1521, 7
        %v1523 = vsub.s32 0, %v1522
        %v1524 = vrot.slane %v1520, %v1523
        %v1525 = vmul.f32 %v1512, %v1524
        %v1526 = vmul.f32 %v1517, %v1524
        %v1527 = vld [vmem:[%s6 + $0x1] sm:$0x1]
        %v1528 = vlaneseq
        %v1529 = vshrl.u32 %v1528, 7
        %v1530 = vsub.s32 0, %v1529
        %v1531 = vrot.slane %v1527, %v1530
        %v1532 = vadd.f32 %v1525, %v1531
        %v1533 = vadd.f32 %v1526, %v1531
        %v1534 = vadd.f32 %v1532, %v1533
        %v1535 = vrot.slane %v1534, 4
        %v1536 = vadd.f32 %v1534, %v1535
        %v1537 = vrot.slane %v1536, 2
        %v1538 = vadd.f32 %v1536, %v1537
        %v1539 = vrot.slane %v1538, 1
        %v1540 = vadd.f32 %v1538, %v1539
        %v1541 = vrcp.pop 16.0
        %v1542 = vmul.f32 %v1540, %v1541
        %v1543 = vld [vmem:[%s7] sm:$0xff]
        %v1544 = vld [vmem:[%s7 + $0x8] sm:$0xff]
        %v1545 = vld [vmem:[%s7 + $0x10] sm:$0xff]
        %v1546 = vld [vmem:[%s7 + $0x18] sm:$0xff]
        %v1547 = vld [vmem:[%s7 + $0x20] sm:$0xff]
        %v1548 = vld [vmem:[%s7 + $0x28] sm:$0xff]
        %v1549 = vld [vmem:[%s7 + $0x30] sm:$0xff]
        %v1550 = vld [vmem:[%s7 + $0x38] sm:$0xff]
        %v1551 = vld [vmem:[%s7 + $0x40] sm:$0xff]
        %v1552 = vld [vmem:[%s7 + $0x48] sm:$0xff]
        %v1553 = vld [vmem:[%s7 + $0x50] sm:$0xff]
        %v1554 = vld [vmem:[%s7 + $0x58] sm:$0xff]
        %v1555 = vld [vmem:[%s7 + $0x60] sm:$0xff]
        %v1556 = vld [vmem:[%s7 + $0x68] sm:$0xff]
        %v1557 = vld [vmem:[%s7 + $0x70] sm:$0xff]
        %v1558 = vld [vmem:[%s7 + $0x78] sm:$0xff]
        %1559 = vmatprep.subr.mxu0 0.0
        %1560 = vmatpush1.msra.mxu0 %v1543
        %1561 = vmatprep.subr.mxu0 0.0
        %1562 = vmatpush1.msra.mxu0 %v1544
        %1563 = vmatprep.subr.mxu0 0.0
        %1564 = vmatpush1.msra.mxu0 %v1545
        %1565 = vmatprep.subr.mxu0 0.0
        %1566 = vmatpush1.msra.mxu0 %v1546
        %1567 = vmatprep.subr.mxu0 0.0
        %1568 = vmatpush1.msra.mxu0 %v1547
        %1569 = vmatprep.subr.mxu0 0.0
        %1570 = vmatpush1.msra.mxu0 %v1548
        %1571 = vmatprep.subr.mxu0 0.0
        %1572 = vmatpush1.msra.mxu0 %v1549
        %1573 = vmatprep.subr.mxu0 0.0
        %1574 = vmatpush1.msra.mxu0 %v1550
        %1575 = vmatprep.subr.mxu0 0.0
        %1576 = vmatpush1.msra.mxu0 %v1551
        %1577 = vmatprep.subr.mxu0 0.0
        %1578 = vmatpush1.msra.mxu0 %v1552
        %1579 = vmatprep.subr.mxu0 0.0
        %1580 = vmatpush1.msra.mxu0 %v1553
        %1581 = vmatprep.subr.mxu0 0.0
        %1582 = vmatpush1.msra.mxu0 %v1554
        %1583 = vmatprep.subr.mxu0 0.0
        %1584 = vmatpush1.msra.mxu0 %v1555
        %1585 = vmatprep.subr.mxu0 0.0
        %1586 = vmatpush1.msra.mxu0 %v1556
        %1587 = vmatprep.subr.mxu0 0.0
        %1588 = vmatpush1.msra.mxu0 %v1557
        %1589 = vmatprep.subr.mxu0 0.0
        %1590 = vmatpush1.msra.mxu0 %v1558
        %1591 = vmatprep.subr.mxu0 0.0
        %1592 = vmatpush1.msra.mxu0 0.0
        %1593 = vmatprep.subr.mxu0 0.0
        %1594 = vmatpush1.msra.mxu0 0.0
        %1595 = vmatprep.subr.mxu0 0.0
        %1596 = vmatpush1.msra.mxu0 0.0
        %1597 = vmatprep.subr.mxu0 0.0
        %1598 = vmatpush1.msra.mxu0 0.0
        %1599 = vmatprep.subr.mxu0 0.0
        %1600 = vmatpush1.msra.mxu0 0.0
        %1601 = vmatprep.subr.mxu0 0.0
        %1602 = vmatpush1.msra.mxu0 0.0
        %1603 = vmatprep.subr.mxu0 0.0
        %1604 = vmatpush1.msra.mxu0 0.0
        %1605 = vmatprep.subr.mxu0 0.0
        %1606 = vmatpush1.msra.mxu0 0.0
        %1607 = vmatprep.subr.mxu0 0.0
        %1608 = vmatpush1.msra.mxu0 0.0
        %1609 = vmatprep.subr.mxu0 0.0
        %1610 = vmatpush1.msra.mxu0 0.0
        %1611 = vmatprep.subr.mxu0 0.0
        %1612 = vmatpush1.msra.mxu0 0.0
        %1613 = vmatprep.subr.mxu0 0.0
        %1614 = vmatpush1.msra.mxu0 0.0
        %1615 = vmatprep.subr.mxu0 0.0
        %1616 = vmatpush1.msra.mxu0 0.0
        %1617 = vmatprep.subr.mxu0 0.0
        %1618 = vmatpush1.msra.mxu0 0.0
        %1619 = vmatprep.subr.mxu0 0.0
        %1620 = vmatpush1.msra.mxu0 0.0
        %1621 = vmatprep.subr.mxu0 0.0
        %1622 = vmatpush1.msra.mxu0 0.0
        %1623 = vmatprep.mubr.f32.mxu0 0.0
        %1624 = vmatmul.mubr.f32.gmra.mrb[0].mxu0 %v1542
        %v1625 = vpop.f32.mrb[0].mxu0
        %v1626 = vadd.f32 0.0, %v1625
        %v1627 = vpop.f32.mrb[0].mxu0
        %1628 = vdwg.mxu0
        %v1629 = vld [vmem:[%s8] sm:$0x1]
        %v1630 = vmul.f32 %v1626, %v1629
        %v1631 = vld [vmem:[%s8 + $0x1] sm:$0x1]
        %v1632 = vadd.f32 %v1630, %v1631
        %v1633 = vmax.f32 %v1632, 0.0
        %v1634 = vld [vmem:[%s9] sm:$0x3]
        %vm1635 = vcmask 15360
        %v1637 = vsel %vm1635, %v1633, 0
        %vm1639 = vcmask 1041408
        %v1641 = vsel %vm1639, %v1634, 0
        %1643 = vmatprep.subr.mxu0 0.0
        %1644 = vmatpush1.msra.mxu0 %v1641
        %1645 = vmatprep.subr.mxu0 0.0
        %1646 = vmatpush1.msra.mxu0 0.0
        %1647 = vmatprep.subr.mxu0 0.0
        %1648 = vmatpush1.msra.mxu0 0.0
        %1649 = vmatprep.subr.mxu0 0.0
        %1650 = vmatpush1.msra.mxu0 0.0
        %1651 = vmatprep.subr.mxu0 0.0
        %1652 = vmatpush1.msra.mxu0 0.0
        %1653 = vmatprep.subr.mxu0 0.0
        %1654 = vmatpush1.msra.mxu0 0.0
        %1655 = vmatprep.subr.mxu0 0.0
        %1656 = vmatpush1.msra.mxu0 0.0
        %1657 = vmatprep.subr.mxu0 0.0
        %1658 = vmatpush1.msra.mxu0 0.0
        %1659 = vmatprep.subr.mxu0 0.0
        %1660 = vmatpush1.msra.mxu0 0.0
        %1661 = vmatprep.subr.mxu0 0.0
        %1662 = vmatpush1.msra.mxu0 0.0
        %1663 = vmatprep.subr.mxu0 0.0
        %1664 = vmatpush1.msra.mxu0 0.0
        %1665 = vmatprep.subr.mxu0 0.0
        %1666 = vmatpush1.msra.mxu0 0.0
        %1667 = vmatprep.subr.mxu0 0.0
        %1668 = vmatpush1.msra.mxu0 0.0
        %1669 = vmatprep.subr.mxu0 0.0
        %1670 = vmatpush1.msra.mxu0 0.0
        %1671 = vmatprep.subr.mxu0 0.0
        %1672 = vmatpush1.msra.mxu0 0.0
        %1673 = vmatprep.subr.mxu0 0.0
        %1674 = vmatpush1.msra.mxu0 0.0
        %1675 = vmatprep.subr.mxu0 0.0
        %1676 = vmatpush1.msra.mxu0 0.0
        %1677 = vmatprep.subr.mxu0 0.0
        %1678 = vmatpush1.msra.mxu0 0.0
        %1679 = vmatprep.subr.mxu0 0.0
        %1680 = vmatpush1.msra.mxu0 0.0
        %1681 = vmatprep.subr.mxu0 0.0
        %1682 = vmatpush1.msra.mxu0 0.0
        %1683 = vmatprep.subr.mxu0 0.0
        %1684 = vmatpush1.msra.mxu0 0.0
        %1685 = vmatprep.subr.mxu0 0.0
        %1686 = vmatpush1.msra.mxu0 0.0
        %1687 = vmatprep.subr.mxu0 0.0
        %1688 = vmatpush1.msra.mxu0 0.0
        %1689 = vmatprep.subr.mxu0 0.0
        %1690 = vmatpush1.msra.mxu0 0.0
        %1691 = vmatprep.subr.mxu0 0.0
        %1692 = vmatpush1.msra.mxu0 0.0
        %1693 = vmatprep.subr.mxu0 0.0
        %1694 = vmatpush1.msra.mxu0 0.0
        %1695 = vmatprep.subr.mxu0 0.0
        %1696 = vmatpush1.msra.mxu0 0.0
        %1697 = vmatprep.subr.mxu0 0.0
        %1698 = vmatpush1.msra.mxu0 0.0
        %1699 = vmatprep.subr.mxu0 0.0
        %1700 = vmatpush1.msra.mxu0 0.0
        %1701 = vmatprep.subr.mxu0 0.0
        %1702 = vmatpush1.msra.mxu0 0.0
        %1703 = vmatprep.subr.mxu0 0.0
        %1704 = vmatpush1.msra.mxu0 0.0
        %1705 = vmatprep.subr.mxu0 0.0
        %1706 = vmatpush1.msra.mxu0 0.0
        %1707 = vmatprep.mubr.f32.mxu0 0.0
        %1708 = vmatmul.mubr.f32.gmra.mrb[0].mxu0 %v1637
        %v1709 = vpop.f32.mrb[0].mxu0
        %v1710 = vadd.f32 0.0, %v1709
        %v1711 = vpop.f32.mrb[0].mxu0
        %1712 = vdwg.mxu0
        %v1713 = vld [vmem:[%s10] sm:$0x1]
        %v1714 = vmul.f32 %v1710, %v1713
        %v1715 = vld [vmem:[%s10 + $0x1] sm:$0x1]
        %v1716 = vadd.f32 %v1714, %v1715
        %v1717 = vadd.f32 %v1716, 3.0
        %v1718 = vmax.f32 %v1717, 0.0
        %v1719 = vmin.f32 %v1718, 6.0
        %v1720 = vmul.f32 %v1719, 0.16666667
        %v1721 = vlaneseq
        %v1722 = vshrl.u32 %v1721, 7
        %v1723 = vsub.s32 0, %v1722
        %v1724 = vrot.slane %v1720, %v1723
        %v1725 = vmul.f32 %v1532, %v1724
        %v1726 = vmul.f32 %v1533, %v1724
        %v1727 = vadd.f32 %v1725, %v663
        %v1728 = vadd.f32 %v1726, %v667
        %1729 = vst [vmem:[%s409] sm:$0xff] %v1727
        %1730 = vst [vmem:[%s409 + $0x8] sm:$0xff] %v1728
        %s1731 = sand.u32 %s271, 1
        %s1732 = scalar_lea.sflag [#allocation5], %s1731
        %s1733 = sand.u32 %s271, 1
        %s1734 = smul.addr %s1733, 16
        %s1735 = scalar_lea.vmem [#allocation8], %s1734
        // Predicated region
        $region73: #{tpu_custom_call.1} parent=63 // pred_check
          %p1736 = pneg %p281
        $region74: #{tpu_custom_call.1} parent=63 // pred_check_branch
          %1738 = sbr.rel (%p1736) target = $region76
        $region75: #{tpu_custom_call.1} parent=63 // pred_region
          %s1740 = ssub.s32 256, 256
          %1741 = vsyncadd %s1732, %s1740
          %s1742 = smul.addr %s27, 2
          %s1743 = smul.addr %s1742, 128
          %s1744 = scalar_lea.hbm %s11, %s1743
          %s1745 = sshll.u32 %s1735, 4
          %s1746 = int_to_ptr.vmem [resolvable:$true] %s1745
          %1751 = dma.vmem_to_hbm [thread:$0]  %s1746, 256, %s1744, %s1732, 128, 128, 8
        $region76: #{tpu_custom_call.1} parent=63 // pred_fallthru
          _
      $region64: #{tpu_custom_call.1} parent=5 // pred_fallthru
        _
      %p1752 = scmp.le.s32.totalorder 2, %s22
      // Predicated region
      $region77: #{tpu_custom_call.1} parent=5 // pred_check
        %p1753 = pneg %p1752
      $region78: #{tpu_custom_call.1} parent=5 // pred_check_branch
        %1755 = sbr.rel (%p1753) target = $region80
      $region79: #{tpu_custom_call.1} parent=5 // pred_region
        %s1756 = ssub.s32 %s22, 2
        // Predicated region
        $region81: #{tpu_custom_call.1} parent=79 // pred_check
          %p1757 = pneg %p287
        $region82: #{tpu_custom_call.1} parent=79 // pred_check_branch
          %1759 = sbr.rel (%p1757) target = $region84
        $region83: #{tpu_custom_call.1} parent=79 // pred_region
          %s1760 = sand.u32 %s272, 1
          %s1761 = scalar_lea.sflag [#allocation5], %s1760
          %s1762 = sand.u32 %s272, 1
          %s1763 = smul.addr %s1762, 16
          %s1764 = scalar_lea.vmem [#allocation8], %s1763
          %1765 = dma.done %s1761, 256
        $region84: #{tpu_custom_call.1} parent=79 // pred_fallthru
          _
      $region80: #{tpu_custom_call.1} parent=5 // pred_fallthru
        _
    $region6: #{tpu_custom_call.1} parent=1 // loop_footer
      %s26 = sadd.s32 1, %s22
    $region7: #{tpu_custom_call.1} parent=1 // loop_footer_branch
      %21 = sbr.rel target = $region3
    $region8: #{tpu_custom_call.1} parent=1 // loop_exit
      _
    %1766 = vsyncpa [#allocation4], 1
    %s1767 = scalar_lea.sflag [#allocation4], 1
    %1768 = vsyncpa %s1767, 1
    %1769 = vsyncpa [#allocation7], 1
    %1770 = vsyncpa [#allocation5], 1
    %s1771 = scalar_lea.sflag [#allocation5], 1
    %1772 = vsyncpa %s1771, 1

</llo_original>
